<compile_context>
chip_gen: v7x
topology: tpu7x:2x2x1
jax: 0.10.0
libtpu: 0.0.40
codegen_flags: <defaults>
</compile_context>

<pallas_src>
import jax
import jax.numpy as jnp
from jax.experimental import pallas as pl
from jax.experimental.pallas import tpu as pltpu

EPS = 1e-5  # PyTorch LayerNorm default eps


# ---------------------------------------------------------------------------
# Kernel
# ---------------------------------------------------------------------------
def _fused_layernorm(h, gamma, beta, inv_w):
    """Affine LayerNorm with single-pass moments (f32 throughout).

    Equivalent to LayerNormCentering (no affine) followed by LayerNormScaling
    (affine): (h - mean) * rsqrt(mean((h - mean)^2) + eps) * gamma + beta.
    """
    s1 = jnp.sum(h, axis=-1, keepdims=True)           # XLU cross-lane reduce
    s2 = jnp.sum(h * h, axis=-1, keepdims=True)       # XLU cross-lane reduce
    mean = s1 * inv_w
    var = jnp.maximum(s2 * inv_w - mean * mean, 0.0)   # guard cancellation
    inv = jax.lax.rsqrt(var + EPS)                     # EUP
    return (h - mean) * inv * gamma + beta


def _mlp_kernel(x_ref, w0_ref, wh_ref, wo_ref, vec_ref, bo_ref, o_ref):
    width = vec_ref.shape[1]
    inv_w = 1.0 / width

    # All per-feature vectors loaded once per grid step (2 vregs total):
    # rows 0-3 = biases b0..b3, rows 4-7 = gammas g0..g3, rows 8-11 = betas be0..be3.
    vecs = vec_ref[...]                                # (12, width) f32
    bov = bo_ref[...]                                  # (1, out_pad) f32

    # ----- Linear(input_size, width): cast x in-kernel, bf16 MXU, f32 acc -----
    xb = x_ref[...].astype(jnp.bfloat16)
    h = jnp.dot(xb, w0_ref[...], preferred_element_type=jnp.float32) + vecs[0:1]
    h = jnp.maximum(h, 0.0)                            # ext.Activation (ReLU)
    h = _fused_layernorm(h, vecs[4:5], vecs[8:9], inv_w)   # ext.Norm (LayerNorm)

    # ----- 3 hidden blocks: Linear -> Centering -> Scaling(affine) -> ReLU -----
    for k in range(3):
        h = jnp.dot(h.astype(jnp.bfloat16), wh_ref[k],
                    preferred_element_type=jnp.float32) + vecs[1 + k:2 + k]
        h = _fused_layernorm(h, vecs[5 + k:6 + k], vecs[9 + k:10 + k], inv_w)
        h = jnp.maximum(h, 0.0)

    # ----- Linear(width, output_size): output columns lane-padded to 128 -----
    out = jnp.dot(h.astype(jnp.bfloat16), wo_ref[...],
                  preferred_element_type=jnp.float32) + bov
    o_ref[...] = out.astype(o_ref.dtype)


# ---------------------------------------------------------------------------
# Wrapper
# ---------------------------------------------------------------------------
def cen_drop_scaling_mlp(x_img, params, *, batch_tile=128):
    """x_img: (B, C, H, W) f32 (NCHW, like PyTorch). Returns (B, output_size) f32."""
    B = x_img.shape[0]
    x = x_img.reshape(B, -1)                      # ext.View(input_size); stays f32
    d_in = x.shape[1]
    width = params["w0"].shape[1]
    out_size = params["wo"].shape[1]

    # Pad batch to a multiple of batch_tile (no-op when B already aligns).
    n_tiles = -(-B // batch_tile)
    B_pad = n_tiles * batch_tile
    if B_pad != B:
        x = jnp.pad(x, ((0, B_pad - B), (0, 0)))

    # Lane-dense output: pad the output projection to a multiple of 128 columns.
    out_pad = -(-out_size // 128) * 128
    wo = jnp.pad(params["wo"].astype(jnp.bfloat16),
                 ((0, 0), (0, out_pad - out_size)))
    bo = jnp.pad(params["bo"].reshape(1, -1).astype(jnp.float32),
                 ((0, 0), (0, out_pad - out_size)))

    # Collapsed parameter arrays (6 input pipelines instead of 18).
    w0 = params["w0"].astype(jnp.bfloat16)                              # (d_in, W)
    wh = jnp.stack([params["w1"], params["w2"], params["w3"]]).astype(jnp.bfloat16)
    vecs = jnp.concatenate([
        jnp.stack([params[f"b{k}"].reshape(-1) for k in range(4)]),
        jnp.stack([params[f"g{k}"].reshape(-1) for k in range(4)]),
        jnp.stack([params[f"be{k}"].reshape(-1) for k in range(4)]),
    ], axis=0).astype(jnp.float32)                                      # (12, W)

    in_specs = [
        pl.BlockSpec((batch_tile, d_in), lambda i: (i, 0)),             # x
        pl.BlockSpec((d_in, width), lambda i: (0, 0)),                  # w0
        pl.BlockSpec((3, width, width), lambda i: (0, 0, 0)),           # w1..w3
        pl.BlockSpec((width, out_pad), lambda i: (0, 0)),               # wo
        pl.BlockSpec((12, width), lambda i: (0, 0)),                    # b/g/be stack
        pl.BlockSpec((1, out_pad), lambda i: (0, 0)),                   # bo
    ]
    out_spec = pl.BlockSpec((batch_tile, out_pad), lambda i: (i, 0))

    fn = pl.pallas_call(
        _mlp_kernel,
        out_shape=jax.ShapeDtypeStruct((B_pad, out_pad), jnp.float32),
        grid_spec=pltpu.PrefetchScalarGridSpec(
            num_scalar_prefetch=0,
            grid=(n_tiles,),
            in_specs=in_specs,
            out_specs=out_spec,
        ),
        compiler_params=pltpu.CompilerParams(
            dimension_semantics=("parallel",)),
    )
    out = fn(x, w0, wh, wo, vecs, bo)
    return out[:B, :out_size]


# ---------------------------------------------------------------------------
# Pure-JAX reference (two-pass norm math, bf16 matmul operands / f32 accumulation)
# ---------------------------------------------------------------------------
def _ref_forward(x_img, p):
    def bdot(a, w):
        return jnp.dot(a.astype(jnp.bfloat16), w.astype(jnp.bfloat16),
                       preferred_element_type=jnp.float32)

    x = x_img.reshape(x_img.shape[0], -1)
    h = bdot(x, p["w0"]) + p["b0"]
    h = jnp.maximum(h, 0.0)
    mu = jnp.mean(h, -1, keepdims=True)
    var = jnp.mean((h - mu) ** 2, -1, keepdims=True)
    h = (h - mu) * jax.lax.rsqrt(var + EPS) * p["g0"] + p["be0"]
    for k in (1, 2, 3):
        h = bdot(h, p[f"w{k}"]) + p[f"b{k}"]
        h = h - jnp.mean(h, -1, keepdims=True)                 # LayerNormCentering
        h = h * jax.lax.rsqrt(jnp.mean(h * h, -1, keepdims=True) + EPS)
        h = h * p[f"g{k}"] + p[f"be{k}"]                       # LayerNormScaling
        h = jnp.maximum(h, 0.0)
    return bdot(h, p["wo"]) + p["bo"]


# ---------------------------------------------------------------------------
# Main
# ---------------------------------------------------------------------------
if __name__ == "__main__":
    # Scaled-down MNIST-style shapes, chosen so the kernel tiling is TPU-friendly:
    #   input image (B, 1, 8, 16) -> input_size=128 (lane-dense LHS), width=128,
    #   output_size=10, depth=4.  B=512, batch_tile=128 -> grid=4: an even multiple
    #   of v7x's 2 TensorCores with >=2 steps per core.
    B, C, H, W_IMG = 512, 1, 8, 16
    INPUT_SIZE = C * H * W_IMG      # 128
    WIDTH = 128
    OUTPUT_SIZE = 10

    key = jax.random.PRNGKey(0)
    keys = jax.random.split(key, 16)

    def lin(kk, fan_in, fan_out):
        w = jax.random.normal(kk, (fan_in, fan_out), jnp.float32) * (1.0 / jnp.sqrt(fan_in))
        b = jnp.zeros((1, fan_out), jnp.float32) + 0.01
        return w, b

    def affine(kk, width):
        g = 1.0 + 0.1 * jax.random.normal(kk, (1, width), jnp.float32)
        be = 0.1 * jax.random.normal(jax.random.fold_in(kk, 1), (1, width), jnp.float32)
        return g, be

    w0, b0 = lin(keys[0], INPUT_SIZE, WIDTH)
    w1, b1 = lin(keys[1], WIDTH, WIDTH)
    w2, b2 = lin(keys[2], WIDTH, WIDTH)
    w3, b3 = lin(keys[3], WIDTH, WIDTH)
    wo, bo = lin(keys[4], WIDTH, OUTPUT_SIZE)
    g0, be0 = affine(keys[6], WIDTH)
    g1, be1 = affine(keys[7], WIDTH)
    g2, be2 = affine(keys[8], WIDTH)
    g3, be3 = affine(keys[9], WIDTH)

    params = {
        "w0": w0, "b0": b0, "g0": g0, "be0": be0,
        "w1": w1, "b1": b1, "g1": g1, "be1": be1,
        "w2": w2, "b2": b2, "g2": g2, "be2": be2,
        "w3": w3, "b3": b3, "g3": g3, "be3": be3,
        "wo": wo, "bo": bo,
    }

    x_img = jax.random.normal(keys[5], (B, C, H, W_IMG), jnp.float32)

    out = cen_drop_scaling_mlp(x_img, params, batch_tile=128)
    out = jax.block_until_ready(out)

    ref = _ref_forward(x_img, params)
    assert out.shape == (B, OUTPUT_SIZE)
    assert jnp.allclose(out, ref, atol=1e-2, rtol=1e-2), "mismatch vs pure-JAX reference"

    print("KERNEL_OK")
</pallas_src>

<mosaic_0001>
module attributes {stable_mosaic.version = 11 : i64} {
  func.func @_mlp_kernel(%arg0: i32, %arg1: memref<128x128xf32, #tpu.memory_space<vmem>>, %arg2: memref<128x128xbf16, #tpu.memory_space<vmem>>, %arg3: memref<3x128x128xbf16, #tpu.memory_space<vmem>>, %arg4: memref<128x128xbf16, #tpu.memory_space<vmem>>, %arg5: memref<12x128xf32, #tpu.memory_space<vmem>>, %arg6: memref<1x128xf32, #tpu.memory_space<vmem>>, %arg7: memref<128x128xf32, #tpu.memory_space<vmem>>) attributes {dimension_semantics = [#tpu.dimension_semantics<parallel>], iteration_bounds = array<i64: 4>, scalar_prefetch = 0 : i64, scratch_operands = 0 : i64, tpu.core_type = #tpu.core_type<tc>, window_params = [{transform_indices = @transform_0, window_bounds = array<i64: 128, 128>}, {pipeline_mode = #tpu.pipeline_mode<synchronous>, transform_indices = @transform_1, window_bounds = array<i64: 128, 128>}, {pipeline_mode = #tpu.pipeline_mode<synchronous>, transform_indices = @transform_2, window_bounds = array<i64: 3, 128, 128>}, {pipeline_mode = #tpu.pipeline_mode<synchronous>, transform_indices = @transform_3, window_bounds = array<i64: 128, 128>}, {pipeline_mode = #tpu.pipeline_mode<synchronous>, transform_indices = @transform_4, window_bounds = array<i64: 12, 128>}, {pipeline_mode = #tpu.pipeline_mode<synchronous>, transform_indices = @transform_5, window_bounds = array<i64: 1, 128>}, {transform_indices = @transform_6, window_bounds = array<i64: 128, 128>}]} {
    %c0 = arith.constant 0 : index
    %c0_0 = arith.constant 0 : index
    %0 = vector.load %arg5[%c0, %c0_0] : memref<12x128xf32, #tpu.memory_space<vmem>>, vector<12x128xf32>
    %c0_1 = arith.constant 0 : index
    %c0_2 = arith.constant 0 : index
    %1 = vector.load %arg6[%c0_1, %c0_2] : memref<1x128xf32, #tpu.memory_space<vmem>>, vector<1x128xf32>
    %c0_3 = arith.constant 0 : index
    %c0_4 = arith.constant 0 : index
    %2 = vector.load %arg1[%c0_3, %c0_4] : memref<128x128xf32, #tpu.memory_space<vmem>>, vector<128x128xf32>
    %3 = arith.truncf %2 : vector<128x128xf32> to vector<128x128xbf16>
    %c0_5 = arith.constant 0 : index
    %c0_6 = arith.constant 0 : index
    %4 = vector.load %arg2[%c0_5, %c0_6] : memref<128x128xbf16, #tpu.memory_space<vmem>>, vector<128x128xbf16>
    %cst = arith.constant dense<0.000000e+00> : vector<128x128xf32>
    %5 = tpu.matmul %3, %4, %cst {dimension_numbers = #tpu.dot_dimension_numbers<[1], [0], [0], [1], [0, 0, 1, 1], [], []>} : vector<128x128xbf16>, vector<128x128xbf16>, vector<128x128xf32> -> vector<128x128xf32>
    %6 = vector.extract_strided_slice %0 {offsets = [0, 0], sizes = [1, 128], strides = [1, 1]} : vector<12x128xf32> to vector<1x128xf32>
    %7 = vector.broadcast %6 : vector<1x128xf32> to vector<128x128xf32>
    %8 = arith.addf %5, %7 : vector<128x128xf32>
    %cst_7 = arith.constant 0.000000e+00 : f32
    %9 = vector.broadcast %cst_7 : f32 to vector<128x128xf32>
    %10 = arith.maximumf %8, %9 : vector<128x128xf32>
    %11 = vector.extract_strided_slice %0 {offsets = [4, 0], sizes = [1, 128], strides = [1, 1]} : vector<12x128xf32> to vector<1x128xf32>
    %12 = vector.extract_strided_slice %0 {offsets = [8, 0], sizes = [1, 128], strides = [1, 1]} : vector<12x128xf32> to vector<1x128xf32>
    %cst_8 = arith.constant dense<0.000000e+00> : vector<128xf32>
    %13 = vector.multi_reduction <add>, %10, %cst_8 [1] : vector<128x128xf32> to vector<128xf32>
    %14 = vector.shape_cast %13 : vector<128xf32> to vector<128x1xf32>
    %15 = arith.mulf %10, %10 : vector<128x128xf32>
    %cst_9 = arith.constant dense<0.000000e+00> : vector<128xf32>
    %16 = vector.multi_reduction <add>, %15, %cst_9 [1] : vector<128x128xf32> to vector<128xf32>
    %17 = vector.shape_cast %16 : vector<128xf32> to vector<128x1xf32>
    %cst_10 = arith.constant 7.812500e-03 : f32
    %18 = vector.broadcast %cst_10 : f32 to vector<128x1xf32>
    %19 = arith.mulf %14, %18 : vector<128x1xf32>
    %cst_11 = arith.constant 7.812500e-03 : f32
    %20 = vector.broadcast %cst_11 : f32 to vector<128x1xf32>
    %21 = arith.mulf %17, %20 : vector<128x1xf32>
    %22 = arith.mulf %19, %19 : vector<128x1xf32>
    %23 = arith.subf %21, %22 : vector<128x1xf32>
    %cst_12 = arith.constant 0.000000e+00 : f32
    %24 = vector.broadcast %cst_12 : f32 to vector<128x1xf32>
    %25 = arith.maximumf %23, %24 : vector<128x1xf32>
    %cst_13 = arith.constant 9.99999974E-6 : f32
    %26 = vector.broadcast %cst_13 : f32 to vector<128x1xf32>
    %27 = arith.addf %25, %26 : vector<128x1xf32>
    %28 = math.rsqrt %27 : vector<128x1xf32>
    %29 = vector.broadcast %19 : vector<128x1xf32> to vector<128x128xf32>
    %30 = arith.subf %10, %29 : vector<128x128xf32>
    %31 = vector.broadcast %28 : vector<128x1xf32> to vector<128x128xf32>
    %32 = arith.mulf %30, %31 : vector<128x128xf32>
    %33 = vector.broadcast %11 : vector<1x128xf32> to vector<128x128xf32>
    %34 = arith.mulf %32, %33 : vector<128x128xf32>
    %35 = vector.broadcast %12 : vector<1x128xf32> to vector<128x128xf32>
    %36 = arith.addf %34, %35 : vector<128x128xf32>
    %37 = arith.truncf %36 : vector<128x128xf32> to vector<128x128xbf16>
    %c0_14 = arith.constant 0 : index
    %c0_15 = arith.constant 0 : index
    %c0_16 = arith.constant 0 : index
    %38 = vector.load %arg3[%c0_14, %c0_15, %c0_16] : memref<3x128x128xbf16, #tpu.memory_space<vmem>>, vector<1x128x128xbf16>
    %39 = vector.shape_cast %38 : vector<1x128x128xbf16> to vector<128x128xbf16>
    %cst_17 = arith.constant dense<0.000000e+00> : vector<128x128xf32>
    %40 = tpu.matmul %37, %39, %cst_17 {dimension_numbers = #tpu.dot_dimension_numbers<[1], [0], [0], [1], [0, 0, 1, 1], [], []>} : vector<128x128xbf16>, vector<128x128xbf16>, vector<128x128xf32> -> vector<128x128xf32>
    %41 = vector.extract_strided_slice %0 {offsets = [1, 0], sizes = [1, 128], strides = [1, 1]} : vector<12x128xf32> to vector<1x128xf32>
    %42 = vector.broadcast %41 : vector<1x128xf32> to vector<128x128xf32>
    %43 = arith.addf %40, %42 : vector<128x128xf32>
    %44 = vector.extract_strided_slice %0 {offsets = [5, 0], sizes = [1, 128], strides = [1, 1]} : vector<12x128xf32> to vector<1x128xf32>
    %45 = vector.extract_strided_slice %0 {offsets = [9, 0], sizes = [1, 128], strides = [1, 1]} : vector<12x128xf32> to vector<1x128xf32>
    %cst_18 = arith.constant dense<0.000000e+00> : vector<128xf32>
    %46 = vector.multi_reduction <add>, %43, %cst_18 [1] : vector<128x128xf32> to vector<128xf32>
    %47 = vector.shape_cast %46 : vector<128xf32> to vector<128x1xf32>
    %48 = arith.mulf %43, %43 : vector<128x128xf32>
    %cst_19 = arith.constant dense<0.000000e+00> : vector<128xf32>
    %49 = vector.multi_reduction <add>, %48, %cst_19 [1] : vector<128x128xf32> to vector<128xf32>
    %50 = vector.shape_cast %49 : vector<128xf32> to vector<128x1xf32>
    %cst_20 = arith.constant 7.812500e-03 : f32
    %51 = vector.broadcast %cst_20 : f32 to vector<128x1xf32>
    %52 = arith.mulf %47, %51 : vector<128x1xf32>
    %cst_21 = arith.constant 7.812500e-03 : f32
    %53 = vector.broadcast %cst_21 : f32 to vector<128x1xf32>
    %54 = arith.mulf %50, %53 : vector<128x1xf32>
    %55 = arith.mulf %52, %52 : vector<128x1xf32>
    %56 = arith.subf %54, %55 : vector<128x1xf32>
    %cst_22 = arith.constant 0.000000e+00 : f32
    %57 = vector.broadcast %cst_22 : f32 to vector<128x1xf32>
    %58 = arith.maximumf %56, %57 : vector<128x1xf32>
    %cst_23 = arith.constant 9.99999974E-6 : f32
    %59 = vector.broadcast %cst_23 : f32 to vector<128x1xf32>
    %60 = arith.addf %58, %59 : vector<128x1xf32>
    %61 = math.rsqrt %60 : vector<128x1xf32>
    %62 = vector.broadcast %52 : vector<128x1xf32> to vector<128x128xf32>
    %63 = arith.subf %43, %62 : vector<128x128xf32>
    %64 = vector.broadcast %61 : vector<128x1xf32> to vector<128x128xf32>
    %65 = arith.mulf %63, %64 : vector<128x128xf32>
    %66 = vector.broadcast %44 : vector<1x128xf32> to vector<128x128xf32>
    %67 = arith.mulf %65, %66 : vector<128x128xf32>
    %68 = vector.broadcast %45 : vector<1x128xf32> to vector<128x128xf32>
    %69 = arith.addf %67, %68 : vector<128x128xf32>
    %cst_24 = arith.constant 0.000000e+00 : f32
    %70 = vector.broadcast %cst_24 : f32 to vector<128x128xf32>
    %71 = arith.maximumf %69, %70 : vector<128x128xf32>
    %72 = arith.truncf %71 : vector<128x128xf32> to vector<128x128xbf16>
    %c1 = arith.constant 1 : index
    %c0_25 = arith.constant 0 : index
    %c0_26 = arith.constant 0 : index
    %73 = vector.load %arg3[%c1, %c0_25, %c0_26] : memref<3x128x128xbf16, #tpu.memory_space<vmem>>, vector<1x128x128xbf16>
    %74 = vector.shape_cast %73 : vector<1x128x128xbf16> to vector<128x128xbf16>
    %cst_27 = arith.constant dense<0.000000e+00> : vector<128x128xf32>
    %75 = tpu.matmul %72, %74, %cst_27 {dimension_numbers = #tpu.dot_dimension_numbers<[1], [0], [0], [1], [0, 0, 1, 1], [], []>} : vector<128x128xbf16>, vector<128x128xbf16>, vector<128x128xf32> -> vector<128x128xf32>
    %76 = vector.extract_strided_slice %0 {offsets = [2, 0], sizes = [1, 128], strides = [1, 1]} : vector<12x128xf32> to vector<1x128xf32>
    %77 = vector.broadcast %76 : vector<1x128xf32> to vector<128x128xf32>
    %78 = arith.addf %75, %77 : vector<128x128xf32>
    %79 = vector.extract_strided_slice %0 {offsets = [6, 0], sizes = [1, 128], strides = [1, 1]} : vector<12x128xf32> to vector<1x128xf32>
    %80 = vector.extract_strided_slice %0 {offsets = [10, 0], sizes = [1, 128], strides = [1, 1]} : vector<12x128xf32> to vector<1x128xf32>
    %cst_28 = arith.constant dense<0.000000e+00> : vector<128xf32>
    %81 = vector.multi_reduction <add>, %78, %cst_28 [1] : vector<128x128xf32> to vector<128xf32>
    %82 = vector.shape_cast %81 : vector<128xf32> to vector<128x1xf32>
    %83 = arith.mulf %78, %78 : vector<128x128xf32>
    %cst_29 = arith.constant dense<0.000000e+00> : vector<128xf32>
    %84 = vector.multi_reduction <add>, %83, %cst_29 [1] : vector<128x128xf32> to vector<128xf32>
    %85 = vector.shape_cast %84 : vector<128xf32> to vector<128x1xf32>
    %cst_30 = arith.constant 7.812500e-03 : f32
    %86 = vector.broadcast %cst_30 : f32 to vector<128x1xf32>
    %87 = arith.mulf %82, %86 : vector<128x1xf32>
    %cst_31 = arith.constant 7.812500e-03 : f32
    %88 = vector.broadcast %cst_31 : f32 to vector<128x1xf32>
    %89 = arith.mulf %85, %88 : vector<128x1xf32>
    %90 = arith.mulf %87, %87 : vector<128x1xf32>
    %91 = arith.subf %89, %90 : vector<128x1xf32>
    %cst_32 = arith.constant 0.000000e+00 : f32
    %92 = vector.broadcast %cst_32 : f32 to vector<128x1xf32>
    %93 = arith.maximumf %91, %92 : vector<128x1xf32>
    %cst_33 = arith.constant 9.99999974E-6 : f32
    %94 = vector.broadcast %cst_33 : f32 to vector<128x1xf32>
    %95 = arith.addf %93, %94 : vector<128x1xf32>
    %96 = math.rsqrt %95 : vector<128x1xf32>
    %97 = vector.broadcast %87 : vector<128x1xf32> to vector<128x128xf32>
    %98 = arith.subf %78, %97 : vector<128x128xf32>
    %99 = vector.broadcast %96 : vector<128x1xf32> to vector<128x128xf32>
    %100 = arith.mulf %98, %99 : vector<128x128xf32>
    %101 = vector.broadcast %79 : vector<1x128xf32> to vector<128x128xf32>
    %102 = arith.mulf %100, %101 : vector<128x128xf32>
    %103 = vector.broadcast %80 : vector<1x128xf32> to vector<128x128xf32>
    %104 = arith.addf %102, %103 : vector<128x128xf32>
    %cst_34 = arith.constant 0.000000e+00 : f32
    %105 = vector.broadcast %cst_34 : f32 to vector<128x128xf32>
    %106 = arith.maximumf %104, %105 : vector<128x128xf32>
    %107 = arith.truncf %106 : vector<128x128xf32> to vector<128x128xbf16>
    %c2 = arith.constant 2 : index
    %c0_35 = arith.constant 0 : index
    %c0_36 = arith.constant 0 : index
    %108 = vector.load %arg3[%c2, %c0_35, %c0_36] : memref<3x128x128xbf16, #tpu.memory_space<vmem>>, vector<1x128x128xbf16>
    %109 = vector.shape_cast %108 : vector<1x128x128xbf16> to vector<128x128xbf16>
    %cst_37 = arith.constant dense<0.000000e+00> : vector<128x128xf32>
    %110 = tpu.matmul %107, %109, %cst_37 {dimension_numbers = #tpu.dot_dimension_numbers<[1], [0], [0], [1], [0, 0, 1, 1], [], []>} : vector<128x128xbf16>, vector<128x128xbf16>, vector<128x128xf32> -> vector<128x128xf32>
    %111 = vector.extract_strided_slice %0 {offsets = [3, 0], sizes = [1, 128], strides = [1, 1]} : vector<12x128xf32> to vector<1x128xf32>
    %112 = vector.broadcast %111 : vector<1x128xf32> to vector<128x128xf32>
    %113 = arith.addf %110, %112 : vector<128x128xf32>
    %114 = vector.extract_strided_slice %0 {offsets = [7, 0], sizes = [1, 128], strides = [1, 1]} : vector<12x128xf32> to vector<1x128xf32>
    %115 = vector.extract_strided_slice %0 {offsets = [11, 0], sizes = [1, 128], strides = [1, 1]} : vector<12x128xf32> to vector<1x128xf32>
    %cst_38 = arith.constant dense<0.000000e+00> : vector<128xf32>
    %116 = vector.multi_reduction <add>, %113, %cst_38 [1] : vector<128x128xf32> to vector<128xf32>
    %117 = vector.shape_cast %116 : vector<128xf32> to vector<128x1xf32>
    %118 = arith.mulf %113, %113 : vector<128x128xf32>
    %cst_39 = arith.constant dense<0.000000e+00> : vector<128xf32>
    %119 = vector.multi_reduction <add>, %118, %cst_39 [1] : vector<128x128xf32> to vector<128xf32>
    %120 = vector.shape_cast %119 : vector<128xf32> to vector<128x1xf32>
    %cst_40 = arith.constant 7.812500e-03 : f32
    %121 = vector.broadcast %cst_40 : f32 to vector<128x1xf32>
    %122 = arith.mulf %117, %121 : vector<128x1xf32>
    %cst_41 = arith.constant 7.812500e-03 : f32
    %123 = vector.broadcast %cst_41 : f32 to vector<128x1xf32>
    %124 = arith.mulf %120, %123 : vector<128x1xf32>
    %125 = arith.mulf %122, %122 : vector<128x1xf32>
    %126 = arith.subf %124, %125 : vector<128x1xf32>
    %cst_42 = arith.constant 0.000000e+00 : f32
    %127 = vector.broadcast %cst_42 : f32 to vector<128x1xf32>
    %128 = arith.maximumf %126, %127 : vector<128x1xf32>
    %cst_43 = arith.constant 9.99999974E-6 : f32
    %129 = vector.broadcast %cst_43 : f32 to vector<128x1xf32>
    %130 = arith.addf %128, %129 : vector<128x1xf32>
    %131 = math.rsqrt %130 : vector<128x1xf32>
    %132 = vector.broadcast %122 : vector<128x1xf32> to vector<128x128xf32>
    %133 = arith.subf %113, %132 : vector<128x128xf32>
    %134 = vector.broadcast %131 : vector<128x1xf32> to vector<128x128xf32>
    %135 = arith.mulf %133, %134 : vector<128x128xf32>
    %136 = vector.broadcast %114 : vector<1x128xf32> to vector<128x128xf32>
    %137 = arith.mulf %135, %136 : vector<128x128xf32>
    %138 = vector.broadcast %115 : vector<1x128xf32> to vector<128x128xf32>
    %139 = arith.addf %137, %138 : vector<128x128xf32>
    %cst_44 = arith.constant 0.000000e+00 : f32
    %140 = vector.broadcast %cst_44 : f32 to vector<128x128xf32>
    %141 = arith.maximumf %139, %140 : vector<128x128xf32>
    %142 = arith.truncf %141 : vector<128x128xf32> to vector<128x128xbf16>
    %c0_45 = arith.constant 0 : index
    %c0_46 = arith.constant 0 : index
    %143 = vector.load %arg4[%c0_45, %c0_46] : memref<128x128xbf16, #tpu.memory_space<vmem>>, vector<128x128xbf16>
    %cst_47 = arith.constant dense<0.000000e+00> : vector<128x128xf32>
    %144 = tpu.matmul %142, %143, %cst_47 {dimension_numbers = #tpu.dot_dimension_numbers<[1], [0], [0], [1], [0, 0, 1, 1], [], []>} : vector<128x128xbf16>, vector<128x128xbf16>, vector<128x128xf32> -> vector<128x128xf32>
    %145 = vector.broadcast %1 : vector<1x128xf32> to vector<128x128xf32>
    %146 = arith.addf %144, %145 : vector<128x128xf32>
    %c0_48 = arith.constant 0 : index
    %c0_49 = arith.constant 0 : index
    %147 = vector.load %arg7[%c0_48, %c0_49] : memref<128x128xf32, #tpu.memory_space<vmem>>, vector<128x128xf32>
    tpu.vector_store %arg7[%c0_48, %c0_49], %146 {strides = array<i32>} : memref<128x128xf32, #tpu.memory_space<vmem>>, vector<128x128xf32>,
    return
  }
  func.func @transform_0(%arg0: i32) -> (i32, i32) {
    %c0_i32 = arith.constant 0 : i32
    %c0_i32_0 = arith.constant 0 : i32
    return %arg0, %c0_i32 : i32, i32
  }
  func.func @transform_1(%arg0: i32) -> (i32, i32) {
    %c0_i32 = arith.constant 0 : i32
    %c0_i32_0 = arith.constant 0 : i32
    %c0_i32_1 = arith.constant 0 : i32
    return %c0_i32, %c0_i32_0 : i32, i32
  }
  func.func @transform_2(%arg0: i32) -> (i32, i32, i32) {
    %c0_i32 = arith.constant 0 : i32
    %c0_i32_0 = arith.constant 0 : i32
    %c0_i32_1 = arith.constant 0 : i32
    %c0_i32_2 = arith.constant 0 : i32
    return %c0_i32, %c0_i32_0, %c0_i32_1 : i32, i32, i32
  }
  func.func @transform_3(%arg0: i32) -> (i32, i32) {
    %c0_i32 = arith.constant 0 : i32
    %c0_i32_0 = arith.constant 0 : i32
    %c0_i32_1 = arith.constant 0 : i32
    return %c0_i32, %c0_i32_0 : i32, i32
  }
  func.func @transform_4(%arg0: i32) -> (i32, i32) {
    %c0_i32 = arith.constant 0 : i32
    %c0_i32_0 = arith.constant 0 : i32
    %c0_i32_1 = arith.constant 0 : i32
    return %c0_i32, %c0_i32_0 : i32, i32
  }
  func.func @transform_5(%arg0: i32) -> (i32, i32) {
    %c0_i32 = arith.constant 0 : i32
    %c0_i32_0 = arith.constant 0 : i32
    %c0_i32_1 = arith.constant 0 : i32
    return %c0_i32, %c0_i32_0 : i32, i32
  }
  func.func @transform_6(%arg0: i32) -> (i32, i32) {
    %c0_i32 = arith.constant 0 : i32
    %c0_i32_0 = arith.constant 0 : i32
    return %arg0, %c0_i32 : i32, i32
  }
}

</mosaic_0001>

<llo_original>
// kernel: tpu_custom_call.1
$region0: #{tpu_custom_call.1}
  #allocation0 [shape = 'u32[]', space=smem, size = 0x4, offset = 0x4, fixed_abs, tag = 'smem constant byte address 0x4 - core index']
  #allocation1 [shape = 'u32[144,128]{1,0:T(1,128)}', space=vmem, size = 0x12000, scoped, tag = 'internal scratch']
  %s0 = inlined_call_operand.hbm [shape: f32[512,128], index: 0, kind: input, shape index: {}]
  %s1 = inlined_call_operand.hbm [shape: bf16[128,128], index: 1, kind: input, shape index: {}]
  %s2 = inlined_call_operand.hbm [shape: bf16[3,128,128], index: 2, kind: input, shape index: {}]
  %s3 = inlined_call_operand.hbm [shape: bf16[128,128], index: 3, kind: input, shape index: {}]
  %s4 = inlined_call_operand.hbm [shape: f32[12,128], index: 4, kind: input, shape index: {}]
  %s5 = inlined_call_operand.vmem [shape: f32[1,128], index: 5, kind: input, shape index: {}]
  %s6 = inlined_call_operand.hbm [shape: f32[512,128], index: 6, kind: output, shape index: {}]
  %s7 = sld [smem:[#allocation0]]
  $region77: #{tpu_custom_call.1} parent=0
    _
  %s9 = ssub.s32 1, %s7
  %s10 = scalar_select 0, %s9, %s7
  $region1: #{tpu_custom_call.1} parent=0
    #allocation2 [shape = 'u8[131072]{0}', space=vmem, size = 0x20000, scoped, tag = 'input window, operand 0']
    #allocation3 [shape = 's32[2]{0}', space=sflag, size = 0x8, scoped, tag = 'scoped memory for tpu_custom_call.1']
    #allocation4 [shape = 's32[2]{0}', space=sflag, size = 0x8, scoped, tag = 'scoped memory for tpu_custom_call.1']
    #allocation5 [shape = 'u8[32768]{0}', space=vmem, size = 0x8000, scoped, tag = 'input window, operand 1, single buffered']
    #allocation6 [shape = 's32[1]{0}', space=sflag, size = 0x4, scoped, tag = 'scoped memory for tpu_custom_call.1']
    #allocation7 [shape = 'u8[98304]{0}', space=vmem, size = 0x18000, scoped, tag = 'input window, operand 2, single buffered']
    #allocation8 [shape = 'u8[32768]{0}', space=vmem, size = 0x8000, scoped, tag = 'input window, operand 3, single buffered']
    #allocation9 [shape = 's32[1]{0}', space=sflag, size = 0x4, scoped, tag = 'scoped memory for tpu_custom_call.1']
    #allocation10 [shape = 'u8[8192]{0}', space=vmem, size = 0x2000, scoped, tag = 'input window, operand 4, single buffered']
    #allocation11 [shape = 'u8[131072]{0}', space=vmem, size = 0x20000, scoped, tag = 'output window, operand 0']
    %11 = vsyncpa [#allocation3], 0
    %s12 = scalar_lea.sflag [#allocation3], 1
    %13 = vsyncpa %s12, 0
    %14 = vsyncpa [#allocation6], 0
    %15 = vsyncpa [#allocation9], 0
    %16 = vsyncpa [#allocation4], 0
    %s17 = scalar_lea.sflag [#allocation4], 1
    %18 = vsyncpa %s17, 0
    loop: start=0, step=1, limit=6
    $region2: #{tpu_custom_call.1} parent=1 // loop_pre_header
      _
    $region3: #{tpu_custom_call.1} parent=1 // loop_header
      %s20 = sphi 0, %s24
      %p21 = scmp.ge.s32.totalorder %s20, 6
      %s30 = sphi 0, %s32
      %s33 = sphi 0, %s30
      %s34 = sphi 0, %s33
      %s50 = sphi 0, %s34
      %s54 = sphi 0, %s54
      %s56 = sphi 0, %s54
      %s57 = sphi 0, %s56
      %s71 = sphi 0, %s57
      %s75 = sphi 0, %s75
      %s77 = sphi 0, %s75
      %s78 = sphi 0, %s77
      %s92 = sphi 0, %s78
      %s96 = sphi 0, %s96
      %s98 = sphi 0, %s96
      %s99 = sphi 0, %s98
      %s113 = sphi 0, %s99
      %s117 = sphi 0, %s117
      %s119 = sphi 0, %s117
      %s120 = sphi 0, %s119
      %s134 = sphi 0, %s120
      %s138 = sphi 0, %s138
      %s140 = sphi 0, %s138
      %s141 = sphi 0, %s140
      %s155 = sphi 0, %s141
      %s161 = sphi 0, %s163
      %s164 = sphi 0, %s161
      %s165 = sphi 0, %s164
      %s181 = sphi 0, %s165
    $region4: #{tpu_custom_call.1} parent=1 // loop_header_branch
      %23 = sbr.rel (%p21) target = $region8
    $region5: #{tpu_custom_call.1} parent=1 // loop_body
      %s25 = ssub.s32 %s20, 1
      %s26 = ssub.s32 %s20, 2
      %s27 = sadd.s32 %s20, 1
      %s28 = ssub.s32 %s20, %s27
      %p29 = scmp.eq.s32.totalorder %s28, 0
      %s31 = sadd.s32 %s30, 1
      %s32 = scalar_select %p29, %s30, %s31
      %p35 = pneg %p29
      %p36 = scmp.eq.s32.totalorder %s20, 3
      %p37 = por %p35, %p36
      %p38 = scmp.ne.s32.totalorder %s30, %s33
      %p39 = scmp.eq.s32.totalorder %s20, 0
      %p40 = por %p38, %p39
      %p41 = scmp.ne.s32.totalorder %s30, %s33
      %p42 = scmp.eq.s32.totalorder %s25, 3
      %p43 = por %p41, %p42
      %p44 = scmp.ne.s32.totalorder %s33, %s34
      %p45 = scmp.eq.s32.totalorder %s25, 0
      %p46 = por %p44, %p45
      %p47 = scmp.ne.s32.totalorder %s33, %s34
      %p48 = scmp.eq.s32.totalorder %s26, 3
      %p49 = por %p47, %p48
      %p51 = scmp.ne.s32.totalorder %s34, %s50
      %p52 = scmp.eq.s32.totalorder %s26, 0
      %p53 = por %p51, %p52
      %s55 = sadd.s32 %s54, 1
      %p58 = scmp.eq.s32.totalorder %s20, 3
      %p59 = scmp.ne.s32.totalorder %s54, %s56
      %p60 = scmp.eq.s32.totalorder %s20, 0
      %p61 = por %p59, %p60
      %p62 = scmp.ne.s32.totalorder %s54, %s56
      %p63 = scmp.eq.s32.totalorder %s25, 3
      %p64 = por %p62, %p63
      %p65 = scmp.ne.s32.totalorder %s56, %s57
      %p66 = scmp.eq.s32.totalorder %s25, 0
      %p67 = por %p65, %p66
      %p68 = scmp.ne.s32.totalorder %s56, %s57
      %p69 = scmp.eq.s32.totalorder %s26, 3
      %p70 = por %p68, %p69
      %p72 = scmp.ne.s32.totalorder %s57, %s71
      %p73 = scmp.eq.s32.totalorder %s26, 0
      %p74 = por %p72, %p73
      %s76 = sadd.s32 %s75, 1
      %p79 = scmp.eq.s32.totalorder %s20, 3
      %p80 = scmp.ne.s32.totalorder %s75, %s77
      %p81 = scmp.eq.s32.totalorder %s20, 0
      %p82 = por %p80, %p81
      %p83 = scmp.ne.s32.totalorder %s75, %s77
      %p84 = scmp.eq.s32.totalorder %s25, 3
      %p85 = por %p83, %p84
      %p86 = scmp.ne.s32.totalorder %s77, %s78
      %p87 = scmp.eq.s32.totalorder %s25, 0
      %p88 = por %p86, %p87
      %p89 = scmp.ne.s32.totalorder %s77, %s78
      %p90 = scmp.eq.s32.totalorder %s26, 3
      %p91 = por %p89, %p90
      %p93 = scmp.ne.s32.totalorder %s78, %s92
      %p94 = scmp.eq.s32.totalorder %s26, 0
      %p95 = por %p93, %p94
      %s97 = sadd.s32 %s96, 1
      %p100 = scmp.eq.s32.totalorder %s20, 3
      %p101 = scmp.ne.s32.totalorder %s96, %s98
      %p102 = scmp.eq.s32.totalorder %s20, 0
      %p103 = por %p101, %p102
      %p104 = scmp.ne.s32.totalorder %s96, %s98
      %p105 = scmp.eq.s32.totalorder %s25, 3
      %p106 = por %p104, %p105
      %p107 = scmp.ne.s32.totalorder %s98, %s99
      %p108 = scmp.eq.s32.totalorder %s25, 0
      %p109 = por %p107, %p108
      %p110 = scmp.ne.s32.totalorder %s98, %s99
      %p111 = scmp.eq.s32.totalorder %s26, 3
      %p112 = por %p110, %p111
      %p114 = scmp.ne.s32.totalorder %s99, %s113
      %p115 = scmp.eq.s32.totalorder %s26, 0
      %p116 = por %p114, %p115
      %s118 = sadd.s32 %s117, 1
      %p121 = scmp.eq.s32.totalorder %s20, 3
      %p122 = scmp.ne.s32.totalorder %s117, %s119
      %p123 = scmp.eq.s32.totalorder %s20, 0
      %p124 = por %p122, %p123
      %p125 = scmp.ne.s32.totalorder %s117, %s119
      %p126 = scmp.eq.s32.totalorder %s25, 3
      %p127 = por %p125, %p126
      %p128 = scmp.ne.s32.totalorder %s119, %s120
      %p129 = scmp.eq.s32.totalorder %s25, 0
      %p130 = por %p128, %p129
      %p131 = scmp.ne.s32.totalorder %s119, %s120
      %p132 = scmp.eq.s32.totalorder %s26, 3
      %p133 = por %p131, %p132
      %p135 = scmp.ne.s32.totalorder %s120, %s134
      %p136 = scmp.eq.s32.totalorder %s26, 0
      %p137 = por %p135, %p136
      %s139 = sadd.s32 %s138, 1
      %p142 = scmp.eq.s32.totalorder %s20, 3
      %p143 = scmp.ne.s32.totalorder %s138, %s140
      %p144 = scmp.eq.s32.totalorder %s20, 0
      %p145 = por %p143, %p144
      %p146 = scmp.ne.s32.totalorder %s138, %s140
      %p147 = scmp.eq.s32.totalorder %s25, 3
      %p148 = por %p146, %p147
      %p149 = scmp.ne.s32.totalorder %s140, %s141
      %p150 = scmp.eq.s32.totalorder %s25, 0
      %p151 = por %p149, %p150
      %p152 = scmp.ne.s32.totalorder %s140, %s141
      %p153 = scmp.eq.s32.totalorder %s26, 3
      %p154 = por %p152, %p153
      %p156 = scmp.ne.s32.totalorder %s141, %s155
      %p157 = scmp.eq.s32.totalorder %s26, 0
      %p158 = por %p156, %p157
      %s159 = ssub.s32 %s20, %s27
      %p160 = scmp.eq.s32.totalorder %s159, 0
      %s162 = sadd.s32 %s161, 1
      %s163 = scalar_select %p160, %s161, %s162
      %p166 = pneg %p160
      %p167 = scmp.eq.s32.totalorder %s20, 3
      %p168 = por %p166, %p167
      %p169 = scmp.ne.s32.totalorder %s161, %s164
      %p170 = scmp.eq.s32.totalorder %s20, 0
      %p171 = por %p169, %p170
      %p172 = scmp.ne.s32.totalorder %s161, %s164
      %p173 = scmp.eq.s32.totalorder %s25, 3
      %p174 = por %p172, %p173
      %p175 = scmp.ne.s32.totalorder %s164, %s165
      %p176 = scmp.eq.s32.totalorder %s25, 0
      %p177 = por %p175, %p176
      %p178 = scmp.ne.s32.totalorder %s164, %s165
      %p179 = scmp.eq.s32.totalorder %s26, 3
      %p180 = por %p178, %p179
      %p182 = scmp.ne.s32.totalorder %s165, %s181
      %p183 = scmp.eq.s32.totalorder %s26, 0
      %p184 = por %p182, %p183
      %p185 = scmp.le.s32.totalorder 1, %s20
      %p186 = scmp.lt.s32.totalorder %s20, 5
      %p187 = pnand %p185, %p186
      %p188 = pneg %p187
      // Predicated region
      $region9: #{tpu_custom_call.1} parent=5 // pred_check
        _
      $region10: #{tpu_custom_call.1} parent=5 // pred_check_branch
        %190 = sbr.rel (%p187) target = $region12
      $region11: #{tpu_custom_call.1} parent=5 // pred_region
        %s191 = ssub.s32 %s20, 1
        // Predicated region
        $region13: #{tpu_custom_call.1} parent=11 // pred_check
          %p192 = pneg %p67
        $region14: #{tpu_custom_call.1} parent=11 // pred_check_branch
          %194 = sbr.rel (%p192) target = $region16
        $region15: #{tpu_custom_call.1} parent=11 // pred_region
          %s196 = ssub.s32 1024, 1024
          %197 = vsyncadd [#allocation6], %s196
          %s198 = sshll.u32 [#allocation5], 4
          %s199 = int_to_ptr.vmem [resolvable:$true] %s198
          %204 = dma.hbm_to_vmem [thread:$0]  %s1, 1024, %s199, [#allocation6], 64, 64, 4
        $region16: #{tpu_custom_call.1} parent=11 // pred_fallthru
          _
        // Predicated region
        $region17: #{tpu_custom_call.1} parent=11 // pred_check
          %p205 = pneg %p88
        $region18: #{tpu_custom_call.1} parent=11 // pred_check_branch
          %207 = sbr.rel (%p205) target = $region20
        $region19: #{tpu_custom_call.1} parent=11 // pred_region
          %s209 = ssub.s32 3072, 3072
          %210 = vsyncadd [#allocation6], %s209
          %s211 = sshll.u32 [#allocation7], 4
          %s212 = int_to_ptr.vmem [resolvable:$true] %s211
          %217 = dma.hbm_to_vmem [thread:$0]  %s2, 3072, %s212, [#allocation6], 64, 64, 4
        $region20: #{tpu_custom_call.1} parent=11 // pred_fallthru
          _
        // Predicated region
        $region21: #{tpu_custom_call.1} parent=11 // pred_check
          %p218 = pneg %p109
        $region22: #{tpu_custom_call.1} parent=11 // pred_check_branch
          %220 = sbr.rel (%p218) target = $region24
        $region23: #{tpu_custom_call.1} parent=11 // pred_region
          %s222 = ssub.s32 1024, 1024
          %223 = vsyncadd [#allocation9], %s222
          %s224 = sshll.u32 [#allocation8], 4
          %s225 = int_to_ptr.vmem [resolvable:$true] %s224
          %230 = dma.hbm_to_vmem [thread:$0]  %s3, 1024, %s225, [#allocation9], 64, 64, 4
        $region24: #{tpu_custom_call.1} parent=11 // pred_fallthru
          _
        // Predicated region
        $region25: #{tpu_custom_call.1} parent=11 // pred_check
          %p231 = pneg %p130
        $region26: #{tpu_custom_call.1} parent=11 // pred_check_branch
          %233 = sbr.rel (%p231) target = $region28
        $region27: #{tpu_custom_call.1} parent=11 // pred_region
          %s235 = ssub.s32 256, 256
          %236 = vsyncadd [#allocation9], %s235
          %s237 = sshll.u32 [#allocation10], 4
          %s238 = int_to_ptr.vmem [resolvable:$true] %s237
          %243 = dma.hbm_to_vmem [thread:$0]  %s4, 256, %s238, [#allocation9], 128, 128, 8
        $region28: #{tpu_custom_call.1} parent=11 // pred_fallthru
          _
        // Predicated region
        $region29: #{tpu_custom_call.1} parent=11 // pred_check
          %p244 = pneg %p151
        $region30: #{tpu_custom_call.1} parent=11 // pred_check_branch
          %246 = sbr.rel (%p244) target = $region32
        $region31: #{tpu_custom_call.1} parent=11 // pred_region
          _
        $region32: #{tpu_custom_call.1} parent=11 // pred_fallthru
          _
      $region12: #{tpu_custom_call.1} parent=5 // pred_fallthru
        _
      %p247 = scmp.lt.s32.totalorder %s20, 4
      // Predicated region
      $region33: #{tpu_custom_call.1} parent=5 // pred_check
        %p248 = pneg %p247
      $region34: #{tpu_custom_call.1} parent=5 // pred_check_branch
        %250 = sbr.rel (%p248) target = $region36
      $region35: #{tpu_custom_call.1} parent=5 // pred_region
        // Predicated region
        $region37: #{tpu_custom_call.1} parent=35 // pred_check
          %p251 = pneg %p40
        $region38: #{tpu_custom_call.1} parent=35 // pred_check_branch
          %253 = sbr.rel (%p251) target = $region40
        $region39: #{tpu_custom_call.1} parent=35 // pred_region
          %s254 = sand.u32 %s30, 1
          %s255 = scalar_lea.sflag [#allocation3], %s254
          %s256 = sand.u32 %s30, 1
          %s257 = smul.addr %s256, 128
          %s258 = scalar_lea.vmem [#allocation2], %s257
          %s259 = smul.u32 16, %s20
          %s261 = ssub.s32 2048, 2048
          %262 = vsyncadd %s255, %s261
          %s263 = smul.addr %s259, 128
          %s264 = scalar_lea.hbm %s0, %s263
          %s265 = sshll.u32 %s258, 4
          %s266 = int_to_ptr.vmem [resolvable:$true] %s265
          %271 = dma.hbm_to_vmem [thread:$0]  %s264, 2048, %s266, %s255, 128, 128, 8
        $region40: #{tpu_custom_call.1} parent=35 // pred_fallthru
          _
      $region36: #{tpu_custom_call.1} parent=5 // pred_fallthru
        _
      %p272 = scmp.le.s32.totalorder 1, %s20
      %p273 = scmp.lt.s32.totalorder %s20, 5
      %p274 = pnand %p272, %p273
      %p275 = pneg %p274
      // Predicated region
      $region41: #{tpu_custom_call.1} parent=5 // pred_check
        _
      $region42: #{tpu_custom_call.1} parent=5 // pred_check_branch
        %277 = sbr.rel (%p274) target = $region44
      $region43: #{tpu_custom_call.1} parent=5 // pred_region
        %s278 = ssub.s32 %s20, 1
        %s279 = sand.u32 %s33, 1
        %s280 = scalar_lea.sflag [#allocation3], %s279
        %s281 = sand.u32 %s33, 1
        %s282 = smul.addr %s281, 128
        %s283 = scalar_lea.vmem [#allocation2], %s282
        // Predicated region
        $region45: #{tpu_custom_call.1} parent=43 // pred_check
          %p284 = pneg %p46
        $region46: #{tpu_custom_call.1} parent=43 // pred_check_branch
          %286 = sbr.rel (%p284) target = $region48
        $region47: #{tpu_custom_call.1} parent=43 // pred_region
          %287 = dma.done %s280, 2048
        $region48: #{tpu_custom_call.1} parent=43 // pred_fallthru
          _
        // Predicated region
        $region49: #{tpu_custom_call.1} parent=43 // pred_check
          %p288 = pneg %p67
        $region50: #{tpu_custom_call.1} parent=43 // pred_check_branch
          %290 = sbr.rel (%p288) target = $region52
        $region51: #{tpu_custom_call.1} parent=43 // pred_region
          %291 = dma.done [#allocation6], 1024
        $region52: #{tpu_custom_call.1} parent=43 // pred_fallthru
          _
        // Predicated region
        $region53: #{tpu_custom_call.1} parent=43 // pred_check
          %p292 = pneg %p88
        $region54: #{tpu_custom_call.1} parent=43 // pred_check_branch
          %294 = sbr.rel (%p292) target = $region56
        $region55: #{tpu_custom_call.1} parent=43 // pred_region
          %295 = dma.done [#allocation6], 3072
        $region56: #{tpu_custom_call.1} parent=43 // pred_fallthru
          _
        // Predicated region
        $region57: #{tpu_custom_call.1} parent=43 // pred_check
          %p296 = pneg %p109
        $region58: #{tpu_custom_call.1} parent=43 // pred_check_branch
          %298 = sbr.rel (%p296) target = $region60
        $region59: #{tpu_custom_call.1} parent=43 // pred_region
          %299 = dma.done [#allocation9], 1024
        $region60: #{tpu_custom_call.1} parent=43 // pred_fallthru
          _
        // Predicated region
        $region61: #{tpu_custom_call.1} parent=43 // pred_check
          %p300 = pneg %p130
        $region62: #{tpu_custom_call.1} parent=43 // pred_check_branch
          %302 = sbr.rel (%p300) target = $region64
        $region63: #{tpu_custom_call.1} parent=43 // pred_region
          %303 = dma.done [#allocation9], 256
        $region64: #{tpu_custom_call.1} parent=43 // pred_fallthru
          _
        %s304 = sand.u32 %s33, 1
        %s305 = scalar_lea.sflag [#allocation3], %s304
        %s306 = sand.u32 %s33, 1
        %s307 = smul.addr %s306, 128
        %s308 = scalar_lea.vmem [#allocation2], %s307
        %p309 = pneg %p46
        %p310 = pneg %p43
        %p311 = pneg %p67
        %p312 = pneg %p64
        %p313 = pneg %p88
        %p314 = pneg %p85
        %p315 = pneg %p109
        %p316 = pneg %p106
        %p317 = pneg %p130
        %p318 = pneg %p127
        %p319 = pneg %p151
        %p320 = pneg %p148
        %p321 = pneg %p177
        %p322 = pneg %p174
        %s323 = sand.u32 %s164, 1
        %s324 = scalar_lea.sflag [#allocation4], %s323
        %s325 = sand.u32 %s164, 1
        %s326 = smul.addr %s325, 128
        %s327 = scalar_lea.vmem [#allocation11], %s326
        %s328 = smul.u32 16, %s25
        %s329 = smul.u32 16, %s25
        %v331 = vld [vmem:[#allocation10] sm:$0xff]
        %v332 = vld [vmem:[#allocation10 + $0x8] sm:$0xf]
        %v333 = vld [vmem:[%s5] sm:$0x1]
        %v334 = vld [vmem:[%s283] sm:$0xff]
        %v335 = vld [vmem:[%s283 + $0x8] sm:$0xff]
        %v336 = vld [vmem:[%s283 + $0x10] sm:$0xff]
        %v337 = vld [vmem:[%s283 + $0x18] sm:$0xff]
        %v338 = vld [vmem:[%s283 + $0x20] sm:$0xff]
        %v339 = vld [vmem:[%s283 + $0x28] sm:$0xff]
        %v340 = vld [vmem:[%s283 + $0x30] sm:$0xff]
        %v341 = vld [vmem:[%s283 + $0x38] sm:$0xff]
        %v342 = vld [vmem:[%s283 + $0x40] sm:$0xff]
        %v343 = vld [vmem:[%s283 + $0x48] sm:$0xff]
        %v344 = vld [vmem:[%s283 + $0x50] sm:$0xff]
        %v345 = vld [vmem:[%s283 + $0x58] sm:$0xff]
        %v346 = vld [vmem:[%s283 + $0x60] sm:$0xff]
        %v347 = vld [vmem:[%s283 + $0x68] sm:$0xff]
        %v348 = vld [vmem:[%s283 + $0x70] sm:$0xff]
        %v349 = vld [vmem:[%s283 + $0x78] sm:$0xff]
        %v350 = vpack.c.bf16 %v335, %v334
        %v351 = vpack.c.bf16 %v337, %v336
        %v352 = vpack.c.bf16 %v339, %v338
        %v353 = vpack.c.bf16 %v341, %v340
        %v354 = vpack.c.bf16 %v343, %v342
        %v355 = vpack.c.bf16 %v345, %v344
        %v356 = vpack.c.bf16 %v347, %v346
        %v357 = vpack.c.bf16 %v349, %v348
        %v358 = vld [vmem:[#allocation5] sm:$0xf]
        %v359 = vld [vmem:[#allocation5 + $0x4] sm:$0xf]
        %v360 = vld [vmem:[#allocation5 + $0x8] sm:$0xf]
        %v361 = vld [vmem:[#allocation5 + $0xc] sm:$0xf]
        %v362 = vld [vmem:[#allocation5 + $0x10] sm:$0xf]
        %v363 = vld [vmem:[#allocation5 + $0x14] sm:$0xf]
        %v364 = vld [vmem:[#allocation5 + $0x18] sm:$0xf]
        %v365 = vld [vmem:[#allocation5 + $0x1c] sm:$0xf]
        %v366 = vld [vmem:[#allocation5 + $0x20] sm:$0xf]
        %v367 = vld [vmem:[#allocation5 + $0x24] sm:$0xf]
        %v368 = vld [vmem:[#allocation5 + $0x28] sm:$0xf]
        %v369 = vld [vmem:[#allocation5 + $0x2c] sm:$0xf]
        %v370 = vld [vmem:[#allocation5 + $0x30] sm:$0xf]
        %v371 = vld [vmem:[#allocation5 + $0x34] sm:$0xf]
        %v372 = vld [vmem:[#allocation5 + $0x38] sm:$0xf]
        %v373 = vld [vmem:[#allocation5 + $0x3c] sm:$0xf]
        %v374 = vlaneseq
        %v375 = vshrl.u32 %v374, 7
        %v376 = vsub.s32 0, %v375
        %v377 = vrot.slane %v331, %v376
        %v394 = vunpack.c.l.b16 %v358
        %v395 = vunpack.c.l.b16 %v359
        %v396 = vunpack.c.l.b16 %v360
        %v397 = vunpack.c.l.b16 %v361
        %v398 = vunpack.c.l.b16 %v362
        %v399 = vunpack.c.l.b16 %v363
        %v400 = vunpack.c.l.b16 %v364
        %v401 = vunpack.c.l.b16 %v365
        %v402 = vunpack.c.l.b16 %v366
        %v403 = vunpack.c.l.b16 %v367
        %v404 = vunpack.c.l.b16 %v368
        %v405 = vunpack.c.l.b16 %v369
        %v406 = vunpack.c.l.b16 %v370
        %v407 = vunpack.c.l.b16 %v371
        %v408 = vunpack.c.l.b16 %v372
        %v409 = vunpack.c.l.b16 %v373
        %v410 = vpack.c.b16 %v395, %v394
        %v411 = vpack.c.b16 %v397, %v396
        %v412 = vpack.c.b16 %v399, %v398
        %v413 = vpack.c.b16 %v401, %v400
        %v414 = vpack.c.b16 %v403, %v402
        %v415 = vpack.c.b16 %v405, %v404
        %v416 = vpack.c.b16 %v407, %v406
        %v417 = vpack.c.b16 %v409, %v408
        %426 = vmatprep.subr.bf16.mxu0 0
        %427 = vmatpush1.bf16.msra.mxu0 %v410
        %428 = vmatprep.subr.bf16.mxu0 0
        %429 = vmatpush1.bf16.msra.mxu0 %v411
        %430 = vmatprep.subr.bf16.mxu0 0
        %431 = vmatpush1.bf16.msra.mxu0 %v412
        %432 = vmatprep.subr.bf16.mxu0 0
        %433 = vmatpush1.bf16.msra.mxu0 %v413
        %434 = vmatprep.subr.bf16.mxu0 0
        %435 = vmatpush1.bf16.msra.mxu0 %v414
        %436 = vmatprep.subr.bf16.mxu0 0
        %437 = vmatpush1.bf16.msra.mxu0 %v415
        %438 = vmatprep.subr.bf16.mxu0 0
        %439 = vmatpush1.bf16.msra.mxu0 %v416
        %440 = vmatprep.subr.bf16.mxu0 0
        %441 = vmatpush1.bf16.msra.mxu0 %v417
        %442 = vmatprep.subr.bf16.mxu0 0
        %443 = vmatpush1.bf16.msra.mxu0 0
        %444 = vmatprep.subr.bf16.mxu0 0
        %445 = vmatpush1.bf16.msra.mxu0 0
        %446 = vmatprep.subr.bf16.mxu0 0
        %447 = vmatpush1.bf16.msra.mxu0 0
        %448 = vmatprep.subr.bf16.mxu0 0
        %449 = vmatpush1.bf16.msra.mxu0 0
        %450 = vmatprep.subr.bf16.mxu0 0
        %451 = vmatpush1.bf16.msra.mxu0 0
        %452 = vmatprep.subr.bf16.mxu0 0
        %453 = vmatpush1.bf16.msra.mxu0 0
        %454 = vmatprep.subr.bf16.mxu0 0
        %455 = vmatpush1.bf16.msra.mxu0 0
        %456 = vmatprep.subr.bf16.mxu0 0
        %457 = vmatpush1.bf16.msra.mxu0 0
        %458 = vmatprep.mubr.bf16.mxu0 0
        %459 = vmatmul.mubr.bf16.gmra.mrb[0].mxu0 %v350
        %v460 = vpop.f32.mrb[0].mxu0
        %v461 = vadd.f32 %v377, %v460
        %v462 = vpop.f32.mrb[0].mxu0
        %v463 = vpop.f32.mrb[0].mxu0
        %v464 = vadd.f32 %v377, %v463
        %v465 = vpop.f32.mrb[0].mxu0
        %466 = vmatprep.mubr.bf16.mxu0 0
        %467 = vmatmul.mubr.bf16.gmra.mrb[0].mxu0 %v351
        %v468 = vpop.f32.mrb[0].mxu0
        %v469 = vadd.f32 %v377, %v468
        %v470 = vpop.f32.mrb[0].mxu0
        %v471 = vpop.f32.mrb[0].mxu0
        %v472 = vadd.f32 %v377, %v471
        %v473 = vpop.f32.mrb[0].mxu0
        %474 = vmatprep.mubr.bf16.mxu0 0
        %475 = vmatmul.mubr.bf16.gmra.mrb[0].mxu0 %v352
        %v476 = vpop.f32.mrb[0].mxu0
        %v477 = vadd.f32 %v377, %v476
        %v478 = vpop.f32.mrb[0].mxu0
        %v479 = vpop.f32.mrb[0].mxu0
        %v480 = vadd.f32 %v377, %v479
        %v481 = vpop.f32.mrb[0].mxu0
        %482 = vmatprep.mubr.bf16.mxu0 0
        %483 = vmatmul.mubr.bf16.gmra.mrb[0].mxu0 %v353
        %v484 = vpop.f32.mrb[0].mxu0
        %v485 = vadd.f32 %v377, %v484
        %v486 = vpop.f32.mrb[0].mxu0
        %v487 = vpop.f32.mrb[0].mxu0
        %v488 = vadd.f32 %v377, %v487
        %v489 = vpop.f32.mrb[0].mxu0
        %490 = vmatprep.mubr.bf16.mxu0 0
        %491 = vmatmul.mubr.bf16.gmra.mrb[0].mxu0 %v354
        %v492 = vpop.f32.mrb[0].mxu0
        %v493 = vadd.f32 %v377, %v492
        %v494 = vpop.f32.mrb[0].mxu0
        %v495 = vpop.f32.mrb[0].mxu0
        %v496 = vadd.f32 %v377, %v495
        %v497 = vpop.f32.mrb[0].mxu0
        %498 = vmatprep.mubr.bf16.mxu0 0
        %499 = vmatmul.mubr.bf16.gmra.mrb[0].mxu0 %v355
        %v500 = vpop.f32.mrb[0].mxu0
        %v501 = vadd.f32 %v377, %v500
        %v502 = vpop.f32.mrb[0].mxu0
        %v503 = vpop.f32.mrb[0].mxu0
        %v504 = vadd.f32 %v377, %v503
        %v505 = vpop.f32.mrb[0].mxu0
        %506 = vmatprep.mubr.bf16.mxu0 0
        %507 = vmatmul.mubr.bf16.gmra.mrb[0].mxu0 %v356
        %v508 = vpop.f32.mrb[0].mxu0
        %v509 = vadd.f32 %v377, %v508
        %v510 = vpop.f32.mrb[0].mxu0
        %v511 = vpop.f32.mrb[0].mxu0
        %v512 = vadd.f32 %v377, %v511
        %v513 = vpop.f32.mrb[0].mxu0
        %514 = vmatprep.mubr.bf16.mxu0 0
        %515 = vmatmul.mubr.bf16.gmra.mrb[0].mxu0 %v357
        %v516 = vpop.f32.mrb[0].mxu0
        %v517 = vadd.f32 %v377, %v516
        %v518 = vpop.f32.mrb[0].mxu0
        %v519 = vpop.f32.mrb[0].mxu0
        %v520 = vadd.f32 %v377, %v519
        %v521 = vpop.f32.mrb[0].mxu0
        %522 = vdwg.mxu0
        %v523 = vmax.f32 %v461, 0.0
        %v524 = vmax.f32 %v464, 0.0
        %v525 = vmax.f32 %v469, 0.0
        %v526 = vmax.f32 %v472, 0.0
        %v527 = vmax.f32 %v477, 0.0
        %v528 = vmax.f32 %v480, 0.0
        %v529 = vmax.f32 %v485, 0.0
        %v530 = vmax.f32 %v488, 0.0
        %v531 = vmax.f32 %v493, 0.0
        %v532 = vmax.f32 %v496, 0.0
        %v533 = vmax.f32 %v501, 0.0
        %v534 = vmax.f32 %v504, 0.0
        %v535 = vmax.f32 %v509, 0.0
        %v536 = vmax.f32 %v512, 0.0
        %v537 = vmax.f32 %v517, 0.0
        %v538 = vmax.f32 %v520, 0.0
        %539 = vadd.xlane.f32.xlu0 %v523
        %v540 = vpop.xlane.xlu0 %539
        %541 = vadd.xlane.f32.xlu0 %v524
        %v542 = vpop.xlane.xlu0 %541
        %543 = vadd.xlane.f32.xlu0 %v525
        %v544 = vpop.xlane.xlu0 %543
        %545 = vadd.xlane.f32.xlu0 %v526
        %v546 = vpop.xlane.xlu0 %545
        %547 = vadd.xlane.f32.xlu0 %v527
        %v548 = vpop.xlane.xlu0 %547
        %549 = vadd.xlane.f32.xlu0 %v528
        %v550 = vpop.xlane.xlu0 %549
        %551 = vadd.xlane.f32.xlu0 %v529
        %v552 = vpop.xlane.xlu0 %551
        %553 = vadd.xlane.f32.xlu0 %v530
        %v554 = vpop.xlane.xlu0 %553
        %555 = vadd.xlane.f32.xlu0 %v531
        %v556 = vpop.xlane.xlu0 %555
        %557 = vadd.xlane.f32.xlu0 %v532
        %v558 = vpop.xlane.xlu0 %557
        %559 = vadd.xlane.f32.xlu0 %v533
        %v560 = vpop.xlane.xlu0 %559
        %561 = vadd.xlane.f32.xlu0 %v534
        %v562 = vpop.xlane.xlu0 %561
        %563 = vadd.xlane.f32.xlu0 %v535
        %v564 = vpop.xlane.xlu0 %563
        %565 = vadd.xlane.f32.xlu0 %v536
        %v566 = vpop.xlane.xlu0 %565
        %567 = vadd.xlane.f32.xlu0 %v537
        %v568 = vpop.xlane.xlu0 %567
        %569 = vadd.xlane.f32.xlu0 %v538
        %v570 = vpop.xlane.xlu0 %569
        %v571 = vmul.f32 %v523, %v523
        %v572 = vmul.f32 %v524, %v524
        %v573 = vmul.f32 %v525, %v525
        %v574 = vmul.f32 %v526, %v526
        %v575 = vmul.f32 %v527, %v527
        %v576 = vmul.f32 %v528, %v528
        %v577 = vmul.f32 %v529, %v529
        %v578 = vmul.f32 %v530, %v530
        %v579 = vmul.f32 %v531, %v531
        %v580 = vmul.f32 %v532, %v532
        %v581 = vmul.f32 %v533, %v533
        %v582 = vmul.f32 %v534, %v534
        %v583 = vmul.f32 %v535, %v535
        %v584 = vmul.f32 %v536, %v536
        %v585 = vmul.f32 %v537, %v537
        %v586 = vmul.f32 %v538, %v538
        %587 = vadd.xlane.f32.xlu0 %v571
        %v588 = vpop.xlane.xlu0 %587
        %589 = vadd.xlane.f32.xlu0 %v572
        %v590 = vpop.xlane.xlu0 %589
        %591 = vadd.xlane.f32.xlu0 %v573
        %v592 = vpop.xlane.xlu0 %591
        %593 = vadd.xlane.f32.xlu0 %v574
        %v594 = vpop.xlane.xlu0 %593
        %595 = vadd.xlane.f32.xlu0 %v575
        %v596 = vpop.xlane.xlu0 %595
        %597 = vadd.xlane.f32.xlu0 %v576
        %v598 = vpop.xlane.xlu0 %597
        %599 = vadd.xlane.f32.xlu0 %v577
        %v600 = vpop.xlane.xlu0 %599
        %601 = vadd.xlane.f32.xlu0 %v578
        %v602 = vpop.xlane.xlu0 %601
        %603 = vadd.xlane.f32.xlu0 %v579
        %v604 = vpop.xlane.xlu0 %603
        %605 = vadd.xlane.f32.xlu0 %v580
        %v606 = vpop.xlane.xlu0 %605
        %607 = vadd.xlane.f32.xlu0 %v581
        %v608 = vpop.xlane.xlu0 %607
        %609 = vadd.xlane.f32.xlu0 %v582
        %v610 = vpop.xlane.xlu0 %609
        %611 = vadd.xlane.f32.xlu0 %v583
        %v612 = vpop.xlane.xlu0 %611
        %613 = vadd.xlane.f32.xlu0 %v584
        %v614 = vpop.xlane.xlu0 %613
        %615 = vadd.xlane.f32.xlu0 %v585
        %v616 = vpop.xlane.xlu0 %615
        %617 = vadd.xlane.f32.xlu0 %v586
        %v618 = vpop.xlane.xlu0 %617
        %v619 = vmul.f32 %v540, 0.0078125
        %v620 = vmul.f32 %v542, 0.0078125
        %v621 = vmul.f32 %v544, 0.0078125
        %v622 = vmul.f32 %v546, 0.0078125
        %v623 = vmul.f32 %v548, 0.0078125
        %v624 = vmul.f32 %v550, 0.0078125
        %v625 = vmul.f32 %v552, 0.0078125
        %v626 = vmul.f32 %v554, 0.0078125
        %v627 = vmul.f32 %v556, 0.0078125
        %v628 = vmul.f32 %v558, 0.0078125
        %v629 = vmul.f32 %v560, 0.0078125
        %v630 = vmul.f32 %v562, 0.0078125
        %v631 = vmul.f32 %v564, 0.0078125
        %v632 = vmul.f32 %v566, 0.0078125
        %v633 = vmul.f32 %v568, 0.0078125
        %v634 = vmul.f32 %v570, 0.0078125
        %v635 = vmul.f32 %v588, 0.0078125
        %v636 = vmul.f32 %v590, 0.0078125
        %v637 = vmul.f32 %v592, 0.0078125
        %v638 = vmul.f32 %v594, 0.0078125
        %v639 = vmul.f32 %v596, 0.0078125
        %v640 = vmul.f32 %v598, 0.0078125
        %v641 = vmul.f32 %v600, 0.0078125
        %v642 = vmul.f32 %v602, 0.0078125
        %v643 = vmul.f32 %v604, 0.0078125
        %v644 = vmul.f32 %v606, 0.0078125
        %v645 = vmul.f32 %v608, 0.0078125
        %v646 = vmul.f32 %v610, 0.0078125
        %v647 = vmul.f32 %v612, 0.0078125
        %v648 = vmul.f32 %v614, 0.0078125
        %v649 = vmul.f32 %v616, 0.0078125
        %v650 = vmul.f32 %v618, 0.0078125
        %v651 = vmul.f32 %v619, %v619
        %v652 = vmul.f32 %v620, %v620
        %v653 = vmul.f32 %v621, %v621
        %v654 = vmul.f32 %v622, %v622
        %v655 = vmul.f32 %v623, %v623
        %v656 = vmul.f32 %v624, %v624
        %v657 = vmul.f32 %v625, %v625
        %v658 = vmul.f32 %v626, %v626
        %v659 = vmul.f32 %v627, %v627
        %v660 = vmul.f32 %v628, %v628
        %v661 = vmul.f32 %v629, %v629
        %v662 = vmul.f32 %v630, %v630
        %v663 = vmul.f32 %v631, %v631
        %v664 = vmul.f32 %v632, %v632
        %v665 = vmul.f32 %v633, %v633
        %v666 = vmul.f32 %v634, %v634
        %v667 = vsub.f32 %v635, %v651
        %v668 = vsub.f32 %v636, %v652
        %v669 = vsub.f32 %v637, %v653
        %v670 = vsub.f32 %v638, %v654
        %v671 = vsub.f32 %v639, %v655
        %v672 = vsub.f32 %v640, %v656
        %v673 = vsub.f32 %v641, %v657
        %v674 = vsub.f32 %v642, %v658
        %v675 = vsub.f32 %v643, %v659
        %v676 = vsub.f32 %v644, %v660
        %v677 = vsub.f32 %v645, %v661
        %v678 = vsub.f32 %v646, %v662
        %v679 = vsub.f32 %v647, %v663
        %v680 = vsub.f32 %v648, %v664
        %v681 = vsub.f32 %v649, %v665
        %v682 = vsub.f32 %v650, %v666
        %v683 = vmax.f32 %v667, 0.0
        %v684 = vmax.f32 %v668, 0.0
        %v685 = vmax.f32 %v669, 0.0
        %v686 = vmax.f32 %v670, 0.0
        %v687 = vmax.f32 %v671, 0.0
        %v688 = vmax.f32 %v672, 0.0
        %v689 = vmax.f32 %v673, 0.0
        %v690 = vmax.f32 %v674, 0.0
        %v691 = vmax.f32 %v675, 0.0
        %v692 = vmax.f32 %v676, 0.0
        %v693 = vmax.f32 %v677, 0.0
        %v694 = vmax.f32 %v678, 0.0
        %v695 = vmax.f32 %v679, 0.0
        %v696 = vmax.f32 %v680, 0.0
        %v697 = vmax.f32 %v681, 0.0
        %v698 = vmax.f32 %v682, 0.0
        %v699 = vadd.f32 %v683, 1e-05
        %v700 = vadd.f32 %v684, 1e-05
        %v701 = vadd.f32 %v685, 1e-05
        %v702 = vadd.f32 %v686, 1e-05
        %v703 = vadd.f32 %v687, 1e-05
        %v704 = vadd.f32 %v688, 1e-05
        %v705 = vadd.f32 %v689, 1e-05
        %v706 = vadd.f32 %v690, 1e-05
        %v707 = vadd.f32 %v691, 1e-05
        %v708 = vadd.f32 %v692, 1e-05
        %v709 = vadd.f32 %v693, 1e-05
        %v710 = vadd.f32 %v694, 1e-05
        %v711 = vadd.f32 %v695, 1e-05
        %v712 = vadd.f32 %v696, 1e-05
        %v713 = vadd.f32 %v697, 1e-05
        %v714 = vadd.f32 %v698, 1e-05
        %v715 = vrsqrt.pop %v699
        %v716 = vrsqrt.pop %v700
        %v717 = vrsqrt.pop %v701
        %v718 = vrsqrt.pop %v702
        %v719 = vrsqrt.pop %v703
        %v720 = vrsqrt.pop %v704
        %v721 = vrsqrt.pop %v705
        %v722 = vrsqrt.pop %v706
        %v723 = vrsqrt.pop %v707
        %v724 = vrsqrt.pop %v708
        %v725 = vrsqrt.pop %v709
        %v726 = vrsqrt.pop %v710
        %v727 = vrsqrt.pop %v711
        %v728 = vrsqrt.pop %v712
        %v729 = vrsqrt.pop %v713
        %v730 = vrsqrt.pop %v714
        %v731 = vsub.f32 %v523, %v619
        %v732 = vsub.f32 %v524, %v620
        %v733 = vsub.f32 %v525, %v621
        %v734 = vsub.f32 %v526, %v622
        %v735 = vsub.f32 %v527, %v623
        %v736 = vsub.f32 %v528, %v624
        %v737 = vsub.f32 %v529, %v625
        %v738 = vsub.f32 %v530, %v626
        %v739 = vsub.f32 %v531, %v627
        %v740 = vsub.f32 %v532, %v628
        %v741 = vsub.f32 %v533, %v629
        %v742 = vsub.f32 %v534, %v630
        %v743 = vsub.f32 %v535, %v631
        %v744 = vsub.f32 %v536, %v632
        %v745 = vsub.f32 %v537, %v633
        %v746 = vsub.f32 %v538, %v634
        %v747 = vmul.f32 %v731, %v715
        %v748 = vmul.f32 %v732, %v716
        %v749 = vmul.f32 %v733, %v717
        %v750 = vmul.f32 %v734, %v718
        %v751 = vmul.f32 %v735, %v719
        %v752 = vmul.f32 %v736, %v720
        %v753 = vmul.f32 %v737, %v721
        %v754 = vmul.f32 %v738, %v722
        %v755 = vmul.f32 %v739, %v723
        %v756 = vmul.f32 %v740, %v724
        %v757 = vmul.f32 %v741, %v725
        %v758 = vmul.f32 %v742, %v726
        %v759 = vmul.f32 %v743, %v727
        %v760 = vmul.f32 %v744, %v728
        %v761 = vmul.f32 %v745, %v729
        %v762 = vmul.f32 %v746, %v730
        %v763 = vlaneseq
        %v764 = vshrl.u32 %v763, 7
        %v765 = vsub.s32 4, %v764
        %v766 = vrot.slane %v331, %v765
        %v767 = vmul.f32 %v747, %v766
        %v768 = vmul.f32 %v748, %v766
        %v769 = vmul.f32 %v749, %v766
        %v770 = vmul.f32 %v750, %v766
        %v771 = vmul.f32 %v751, %v766
        %v772 = vmul.f32 %v752, %v766
        %v773 = vmul.f32 %v753, %v766
        %v774 = vmul.f32 %v754, %v766
        %v775 = vmul.f32 %v755, %v766
        %v776 = vmul.f32 %v756, %v766
        %v777 = vmul.f32 %v757, %v766
        %v778 = vmul.f32 %v758, %v766
        %v779 = vmul.f32 %v759, %v766
        %v780 = vmul.f32 %v760, %v766
        %v781 = vmul.f32 %v761, %v766
        %v782 = vmul.f32 %v762, %v766
        %v783 = vlaneseq
        %v784 = vshrl.u32 %v783, 7
        %v785 = vsub.s32 0, %v784
        %v786 = vrot.slane %v332, %v785
        %v787 = vadd.f32 %v767, %v786
        %v788 = vadd.f32 %v768, %v786
        %v789 = vadd.f32 %v769, %v786
        %v790 = vadd.f32 %v770, %v786
        %v791 = vadd.f32 %v771, %v786
        %v792 = vadd.f32 %v772, %v786
        %v793 = vadd.f32 %v773, %v786
        %v794 = vadd.f32 %v774, %v786
        %v795 = vadd.f32 %v775, %v786
        %v796 = vadd.f32 %v776, %v786
        %v797 = vadd.f32 %v777, %v786
        %v798 = vadd.f32 %v778, %v786
        %v799 = vadd.f32 %v779, %v786
        %v800 = vadd.f32 %v780, %v786
        %v801 = vadd.f32 %v781, %v786
        %v802 = vadd.f32 %v782, %v786
        %v803 = vpack.c.bf16 %v788, %v787
        %v804 = vpack.c.bf16 %v790, %v789
        %v805 = vpack.c.bf16 %v792, %v791
        %v806 = vpack.c.bf16 %v794, %v793
        %v807 = vpack.c.bf16 %v796, %v795
        %v808 = vpack.c.bf16 %v798, %v797
        %v809 = vpack.c.bf16 %v800, %v799
        %v810 = vpack.c.bf16 %v802, %v801
        %v811 = vld [vmem:[#allocation7] sm:$0xf]
        %v812 = vld [vmem:[#allocation7 + $0x4] sm:$0xf]
        %v813 = vld [vmem:[#allocation7 + $0x8] sm:$0xf]
        %v814 = vld [vmem:[#allocation7 + $0xc] sm:$0xf]
        %v815 = vld [vmem:[#allocation7 + $0x10] sm:$0xf]
        %v816 = vld [vmem:[#allocation7 + $0x14] sm:$0xf]
        %v817 = vld [vmem:[#allocation7 + $0x18] sm:$0xf]
        %v818 = vld [vmem:[#allocation7 + $0x1c] sm:$0xf]
        %v819 = vld [vmem:[#allocation7 + $0x20] sm:$0xf]
        %v820 = vld [vmem:[#allocation7 + $0x24] sm:$0xf]
        %v821 = vld [vmem:[#allocation7 + $0x28] sm:$0xf]
        %v822 = vld [vmem:[#allocation7 + $0x2c] sm:$0xf]
        %v823 = vld [vmem:[#allocation7 + $0x30] sm:$0xf]
        %v824 = vld [vmem:[#allocation7 + $0x34] sm:$0xf]
        %v825 = vld [vmem:[#allocation7 + $0x38] sm:$0xf]
        %v826 = vld [vmem:[#allocation7 + $0x3c] sm:$0xf]
        %v827 = vlaneseq
        %v828 = vshrl.u32 %v827, 7
        %v829 = vsub.s32 1, %v828
        %v830 = vrot.slane %v331, %v829
        %v847 = vunpack.c.l.b16 %v811
        %v848 = vunpack.c.l.b16 %v812
        %v849 = vunpack.c.l.b16 %v813
        %v850 = vunpack.c.l.b16 %v814
        %v851 = vunpack.c.l.b16 %v815
        %v852 = vunpack.c.l.b16 %v816
        %v853 = vunpack.c.l.b16 %v817
        %v854 = vunpack.c.l.b16 %v818
        %v855 = vunpack.c.l.b16 %v819
        %v856 = vunpack.c.l.b16 %v820
        %v857 = vunpack.c.l.b16 %v821
        %v858 = vunpack.c.l.b16 %v822
        %v859 = vunpack.c.l.b16 %v823
        %v860 = vunpack.c.l.b16 %v824
        %v861 = vunpack.c.l.b16 %v825
        %v862 = vunpack.c.l.b16 %v826
        %v863 = vpack.c.b16 %v848, %v847
        %v864 = vpack.c.b16 %v850, %v849
        %v865 = vpack.c.b16 %v852, %v851
        %v866 = vpack.c.b16 %v854, %v853
        %v867 = vpack.c.b16 %v856, %v855
        %v868 = vpack.c.b16 %v858, %v857
        %v869 = vpack.c.b16 %v860, %v859
        %v870 = vpack.c.b16 %v862, %v861
        %879 = vmatprep.subr.bf16.mxu0 0
        %880 = vmatpush1.bf16.msra.mxu0 %v863
        %881 = vmatprep.subr.bf16.mxu0 0
        %882 = vmatpush1.bf16.msra.mxu0 %v864
        %883 = vmatprep.subr.bf16.mxu0 0
        %884 = vmatpush1.bf16.msra.mxu0 %v865
        %885 = vmatprep.subr.bf16.mxu0 0
        %886 = vmatpush1.bf16.msra.mxu0 %v866
        %887 = vmatprep.subr.bf16.mxu0 0
        %888 = vmatpush1.bf16.msra.mxu0 %v867
        %889 = vmatprep.subr.bf16.mxu0 0
        %890 = vmatpush1.bf16.msra.mxu0 %v868
        %891 = vmatprep.subr.bf16.mxu0 0
        %892 = vmatpush1.bf16.msra.mxu0 %v869
        %893 = vmatprep.subr.bf16.mxu0 0
        %894 = vmatpush1.bf16.msra.mxu0 %v870
        %895 = vmatprep.subr.bf16.mxu0 0
        %896 = vmatpush1.bf16.msra.mxu0 0
        %897 = vmatprep.subr.bf16.mxu0 0
        %898 = vmatpush1.bf16.msra.mxu0 0
        %899 = vmatprep.subr.bf16.mxu0 0
        %900 = vmatpush1.bf16.msra.mxu0 0
        %901 = vmatprep.subr.bf16.mxu0 0
        %902 = vmatpush1.bf16.msra.mxu0 0
        %903 = vmatprep.subr.bf16.mxu0 0
        %904 = vmatpush1.bf16.msra.mxu0 0
        %905 = vmatprep.subr.bf16.mxu0 0
        %906 = vmatpush1.bf16.msra.mxu0 0
        %907 = vmatprep.subr.bf16.mxu0 0
        %908 = vmatpush1.bf16.msra.mxu0 0
        %909 = vmatprep.subr.bf16.mxu0 0
        %910 = vmatpush1.bf16.msra.mxu0 0
        %911 = vmatprep.mubr.bf16.mxu0 0
        %912 = vmatmul.mubr.bf16.gmra.mrb[0].mxu0 %v803
        %v913 = vpop.f32.mrb[0].mxu0
        %v914 = vadd.f32 %v830, %v913
        %v915 = vpop.f32.mrb[0].mxu0
        %v916 = vpop.f32.mrb[0].mxu0
        %v917 = vadd.f32 %v830, %v916
        %v918 = vpop.f32.mrb[0].mxu0
        %919 = vmatprep.mubr.bf16.mxu0 0
        %920 = vmatmul.mubr.bf16.gmra.mrb[0].mxu0 %v804
        %v921 = vpop.f32.mrb[0].mxu0
        %v922 = vadd.f32 %v830, %v921
        %v923 = vpop.f32.mrb[0].mxu0
        %v924 = vpop.f32.mrb[0].mxu0
        %v925 = vadd.f32 %v830, %v924
        %v926 = vpop.f32.mrb[0].mxu0
        %927 = vmatprep.mubr.bf16.mxu0 0
        %928 = vmatmul.mubr.bf16.gmra.mrb[0].mxu0 %v805
        %v929 = vpop.f32.mrb[0].mxu0
        %v930 = vadd.f32 %v830, %v929
        %v931 = vpop.f32.mrb[0].mxu0
        %v932 = vpop.f32.mrb[0].mxu0
        %v933 = vadd.f32 %v830, %v932
        %v934 = vpop.f32.mrb[0].mxu0
        %935 = vmatprep.mubr.bf16.mxu0 0
        %936 = vmatmul.mubr.bf16.gmra.mrb[0].mxu0 %v806
        %v937 = vpop.f32.mrb[0].mxu0
        %v938 = vadd.f32 %v830, %v937
        %v939 = vpop.f32.mrb[0].mxu0
        %v940 = vpop.f32.mrb[0].mxu0
        %v941 = vadd.f32 %v830, %v940
        %v942 = vpop.f32.mrb[0].mxu0
        %943 = vmatprep.mubr.bf16.mxu0 0
        %944 = vmatmul.mubr.bf16.gmra.mrb[0].mxu0 %v807
        %v945 = vpop.f32.mrb[0].mxu0
        %v946 = vadd.f32 %v830, %v945
        %v947 = vpop.f32.mrb[0].mxu0
        %v948 = vpop.f32.mrb[0].mxu0
        %v949 = vadd.f32 %v830, %v948
        %v950 = vpop.f32.mrb[0].mxu0
        %951 = vmatprep.mubr.bf16.mxu0 0
        %952 = vmatmul.mubr.bf16.gmra.mrb[0].mxu0 %v808
        %v953 = vpop.f32.mrb[0].mxu0
        %v954 = vadd.f32 %v830, %v953
        %v955 = vpop.f32.mrb[0].mxu0
        %v956 = vpop.f32.mrb[0].mxu0
        %v957 = vadd.f32 %v830, %v956
        %v958 = vpop.f32.mrb[0].mxu0
        %959 = vmatprep.mubr.bf16.mxu0 0
        %960 = vmatmul.mubr.bf16.gmra.mrb[0].mxu0 %v809
        %v961 = vpop.f32.mrb[0].mxu0
        %v962 = vadd.f32 %v830, %v961
        %v963 = vpop.f32.mrb[0].mxu0
        %v964 = vpop.f32.mrb[0].mxu0
        %v965 = vadd.f32 %v830, %v964
        %v966 = vpop.f32.mrb[0].mxu0
        %967 = vmatprep.mubr.bf16.mxu0 0
        %968 = vmatmul.mubr.bf16.gmra.mrb[0].mxu0 %v810
        %v969 = vpop.f32.mrb[0].mxu0
        %v970 = vadd.f32 %v830, %v969
        %v971 = vpop.f32.mrb[0].mxu0
        %v972 = vpop.f32.mrb[0].mxu0
        %v973 = vadd.f32 %v830, %v972
        %v974 = vpop.f32.mrb[0].mxu0
        %975 = vdwg.mxu0
        %976 = vadd.xlane.f32.xlu0 %v914
        %v977 = vpop.xlane.xlu0 %976
        %978 = vadd.xlane.f32.xlu0 %v917
        %v979 = vpop.xlane.xlu0 %978
        %980 = vadd.xlane.f32.xlu0 %v922
        %v981 = vpop.xlane.xlu0 %980
        %982 = vadd.xlane.f32.xlu0 %v925
        %v983 = vpop.xlane.xlu0 %982
        %984 = vadd.xlane.f32.xlu0 %v930
        %v985 = vpop.xlane.xlu0 %984
        %986 = vadd.xlane.f32.xlu0 %v933
        %v987 = vpop.xlane.xlu0 %986
        %988 = vadd.xlane.f32.xlu0 %v938
        %v989 = vpop.xlane.xlu0 %988
        %990 = vadd.xlane.f32.xlu0 %v941
        %v991 = vpop.xlane.xlu0 %990
        %992 = vadd.xlane.f32.xlu0 %v946
        %v993 = vpop.xlane.xlu0 %992
        %994 = vadd.xlane.f32.xlu0 %v949
        %v995 = vpop.xlane.xlu0 %994
        %996 = vadd.xlane.f32.xlu0 %v954
        %v997 = vpop.xlane.xlu0 %996
        %998 = vadd.xlane.f32.xlu0 %v957
        %v999 = vpop.xlane.xlu0 %998
        %1000 = vadd.xlane.f32.xlu0 %v962
        %v1001 = vpop.xlane.xlu0 %1000
        %1002 = vadd.xlane.f32.xlu0 %v965
        %v1003 = vpop.xlane.xlu0 %1002
        %1004 = vadd.xlane.f32.xlu0 %v970
        %v1005 = vpop.xlane.xlu0 %1004
        %1006 = vadd.xlane.f32.xlu0 %v973
        %v1007 = vpop.xlane.xlu0 %1006
        %v1008 = vmul.f32 %v914, %v914
        %v1009 = vmul.f32 %v917, %v917
        %v1010 = vmul.f32 %v922, %v922
        %v1011 = vmul.f32 %v925, %v925
        %v1012 = vmul.f32 %v930, %v930
        %v1013 = vmul.f32 %v933, %v933
        %v1014 = vmul.f32 %v938, %v938
        %v1015 = vmul.f32 %v941, %v941
        %v1016 = vmul.f32 %v946, %v946
        %v1017 = vmul.f32 %v949, %v949
        %v1018 = vmul.f32 %v954, %v954
        %v1019 = vmul.f32 %v957, %v957
        %v1020 = vmul.f32 %v962, %v962
        %v1021 = vmul.f32 %v965, %v965
        %v1022 = vmul.f32 %v970, %v970
        %v1023 = vmul.f32 %v973, %v973
        %1024 = vadd.xlane.f32.xlu0 %v1008
        %v1025 = vpop.xlane.xlu0 %1024
        %1026 = vadd.xlane.f32.xlu0 %v1009
        %v1027 = vpop.xlane.xlu0 %1026
        %1028 = vadd.xlane.f32.xlu0 %v1010
        %v1029 = vpop.xlane.xlu0 %1028
        %1030 = vadd.xlane.f32.xlu0 %v1011
        %v1031 = vpop.xlane.xlu0 %1030
        %1032 = vadd.xlane.f32.xlu0 %v1012
        %v1033 = vpop.xlane.xlu0 %1032
        %1034 = vadd.xlane.f32.xlu0 %v1013
        %v1035 = vpop.xlane.xlu0 %1034
        %1036 = vadd.xlane.f32.xlu0 %v1014
        %v1037 = vpop.xlane.xlu0 %1036
        %1038 = vadd.xlane.f32.xlu0 %v1015
        %v1039 = vpop.xlane.xlu0 %1038
        %1040 = vadd.xlane.f32.xlu0 %v1016
        %v1041 = vpop.xlane.xlu0 %1040
        %1042 = vadd.xlane.f32.xlu0 %v1017
        %v1043 = vpop.xlane.xlu0 %1042
        %1044 = vadd.xlane.f32.xlu0 %v1018
        %v1045 = vpop.xlane.xlu0 %1044
        %1046 = vadd.xlane.f32.xlu0 %v1019
        %v1047 = vpop.xlane.xlu0 %1046
        %1048 = vadd.xlane.f32.xlu0 %v1020
        %v1049 = vpop.xlane.xlu0 %1048
        %1050 = vadd.xlane.f32.xlu0 %v1021
        %v1051 = vpop.xlane.xlu0 %1050
        %1052 = vadd.xlane.f32.xlu0 %v1022
        %v1053 = vpop.xlane.xlu0 %1052
        %1054 = vadd.xlane.f32.xlu0 %v1023
        %v1055 = vpop.xlane.xlu0 %1054
        %v1056 = vmul.f32 %v977, 0.0078125
        %v1057 = vmul.f32 %v979, 0.0078125
        %v1058 = vmul.f32 %v981, 0.0078125
        %v1059 = vmul.f32 %v983, 0.0078125
        %v1060 = vmul.f32 %v985, 0.0078125
        %v1061 = vmul.f32 %v987, 0.0078125
        %v1062 = vmul.f32 %v989, 0.0078125
        %v1063 = vmul.f32 %v991, 0.0078125
        %v1064 = vmul.f32 %v993, 0.0078125
        %v1065 = vmul.f32 %v995, 0.0078125
        %v1066 = vmul.f32 %v997, 0.0078125
        %v1067 = vmul.f32 %v999, 0.0078125
        %v1068 = vmul.f32 %v1001, 0.0078125
        %v1069 = vmul.f32 %v1003, 0.0078125
        %v1070 = vmul.f32 %v1005, 0.0078125
        %v1071 = vmul.f32 %v1007, 0.0078125
        %v1072 = vmul.f32 %v1025, 0.0078125
        %v1073 = vmul.f32 %v1027, 0.0078125
        %v1074 = vmul.f32 %v1029, 0.0078125
        %v1075 = vmul.f32 %v1031, 0.0078125
        %v1076 = vmul.f32 %v1033, 0.0078125
        %v1077 = vmul.f32 %v1035, 0.0078125
        %v1078 = vmul.f32 %v1037, 0.0078125
        %v1079 = vmul.f32 %v1039, 0.0078125
        %v1080 = vmul.f32 %v1041, 0.0078125
        %v1081 = vmul.f32 %v1043, 0.0078125
        %v1082 = vmul.f32 %v1045, 0.0078125
        %v1083 = vmul.f32 %v1047, 0.0078125
        %v1084 = vmul.f32 %v1049, 0.0078125
        %v1085 = vmul.f32 %v1051, 0.0078125
        %v1086 = vmul.f32 %v1053, 0.0078125
        %v1087 = vmul.f32 %v1055, 0.0078125
        %v1088 = vmul.f32 %v1056, %v1056
        %v1089 = vmul.f32 %v1057, %v1057
        %v1090 = vmul.f32 %v1058, %v1058
        %v1091 = vmul.f32 %v1059, %v1059
        %v1092 = vmul.f32 %v1060, %v1060
        %v1093 = vmul.f32 %v1061, %v1061
        %v1094 = vmul.f32 %v1062, %v1062
        %v1095 = vmul.f32 %v1063, %v1063
        %v1096 = vmul.f32 %v1064, %v1064
        %v1097 = vmul.f32 %v1065, %v1065
        %v1098 = vmul.f32 %v1066, %v1066
        %v1099 = vmul.f32 %v1067, %v1067
        %v1100 = vmul.f32 %v1068, %v1068
        %v1101 = vmul.f32 %v1069, %v1069
        %v1102 = vmul.f32 %v1070, %v1070
        %v1103 = vmul.f32 %v1071, %v1071
        %v1104 = vsub.f32 %v1072, %v1088
        %v1105 = vsub.f32 %v1073, %v1089
        %v1106 = vsub.f32 %v1074, %v1090
        %v1107 = vsub.f32 %v1075, %v1091
        %v1108 = vsub.f32 %v1076, %v1092
        %v1109 = vsub.f32 %v1077, %v1093
        %v1110 = vsub.f32 %v1078, %v1094
        %v1111 = vsub.f32 %v1079, %v1095
        %v1112 = vsub.f32 %v1080, %v1096
        %v1113 = vsub.f32 %v1081, %v1097
        %v1114 = vsub.f32 %v1082, %v1098
        %v1115 = vsub.f32 %v1083, %v1099
        %v1116 = vsub.f32 %v1084, %v1100
        %v1117 = vsub.f32 %v1085, %v1101
        %v1118 = vsub.f32 %v1086, %v1102
        %v1119 = vsub.f32 %v1087, %v1103
        %v1120 = vmax.f32 %v1104, 0.0
        %v1121 = vmax.f32 %v1105, 0.0
        %v1122 = vmax.f32 %v1106, 0.0
        %v1123 = vmax.f32 %v1107, 0.0
        %v1124 = vmax.f32 %v1108, 0.0
        %v1125 = vmax.f32 %v1109, 0.0
        %v1126 = vmax.f32 %v1110, 0.0
        %v1127 = vmax.f32 %v1111, 0.0
        %v1128 = vmax.f32 %v1112, 0.0
        %v1129 = vmax.f32 %v1113, 0.0
        %v1130 = vmax.f32 %v1114, 0.0
        %v1131 = vmax.f32 %v1115, 0.0
        %v1132 = vmax.f32 %v1116, 0.0
        %v1133 = vmax.f32 %v1117, 0.0
        %v1134 = vmax.f32 %v1118, 0.0
        %v1135 = vmax.f32 %v1119, 0.0
        %v1136 = vadd.f32 %v1120, 1e-05
        %v1137 = vadd.f32 %v1121, 1e-05
        %v1138 = vadd.f32 %v1122, 1e-05
        %v1139 = vadd.f32 %v1123, 1e-05
        %v1140 = vadd.f32 %v1124, 1e-05
        %v1141 = vadd.f32 %v1125, 1e-05
        %v1142 = vadd.f32 %v1126, 1e-05
        %v1143 = vadd.f32 %v1127, 1e-05
        %v1144 = vadd.f32 %v1128, 1e-05
        %v1145 = vadd.f32 %v1129, 1e-05
        %v1146 = vadd.f32 %v1130, 1e-05
        %v1147 = vadd.f32 %v1131, 1e-05
        %v1148 = vadd.f32 %v1132, 1e-05
        %v1149 = vadd.f32 %v1133, 1e-05
        %v1150 = vadd.f32 %v1134, 1e-05
        %v1151 = vadd.f32 %v1135, 1e-05
        %v1152 = vrsqrt.pop %v1136
        %v1153 = vrsqrt.pop %v1137
        %v1154 = vrsqrt.pop %v1138
        %v1155 = vrsqrt.pop %v1139
        %v1156 = vrsqrt.pop %v1140
        %v1157 = vrsqrt.pop %v1141
        %v1158 = vrsqrt.pop %v1142
        %v1159 = vrsqrt.pop %v1143
        %v1160 = vrsqrt.pop %v1144
        %v1161 = vrsqrt.pop %v1145
        %v1162 = vrsqrt.pop %v1146
        %v1163 = vrsqrt.pop %v1147
        %v1164 = vrsqrt.pop %v1148
        %v1165 = vrsqrt.pop %v1149
        %v1166 = vrsqrt.pop %v1150
        %v1167 = vrsqrt.pop %v1151
        %v1168 = vsub.f32 %v914, %v1056
        %v1169 = vsub.f32 %v917, %v1057
        %v1170 = vsub.f32 %v922, %v1058
        %v1171 = vsub.f32 %v925, %v1059
        %v1172 = vsub.f32 %v930, %v1060
        %v1173 = vsub.f32 %v933, %v1061
        %v1174 = vsub.f32 %v938, %v1062
        %v1175 = vsub.f32 %v941, %v1063
        %v1176 = vsub.f32 %v946, %v1064
        %v1177 = vsub.f32 %v949, %v1065
        %v1178 = vsub.f32 %v954, %v1066
        %v1179 = vsub.f32 %v957, %v1067
        %v1180 = vsub.f32 %v962, %v1068
        %v1181 = vsub.f32 %v965, %v1069
        %v1182 = vsub.f32 %v970, %v1070
        %v1183 = vsub.f32 %v973, %v1071
        %v1184 = vmul.f32 %v1168, %v1152
        %v1185 = vmul.f32 %v1169, %v1153
        %v1186 = vmul.f32 %v1170, %v1154
        %v1187 = vmul.f32 %v1171, %v1155
        %v1188 = vmul.f32 %v1172, %v1156
        %v1189 = vmul.f32 %v1173, %v1157
        %v1190 = vmul.f32 %v1174, %v1158
        %v1191 = vmul.f32 %v1175, %v1159
        %v1192 = vmul.f32 %v1176, %v1160
        %v1193 = vmul.f32 %v1177, %v1161
        %v1194 = vmul.f32 %v1178, %v1162
        %v1195 = vmul.f32 %v1179, %v1163
        %v1196 = vmul.f32 %v1180, %v1164
        %v1197 = vmul.f32 %v1181, %v1165
        %v1198 = vmul.f32 %v1182, %v1166
        %v1199 = vmul.f32 %v1183, %v1167
        %v1200 = vlaneseq
        %v1201 = vshrl.u32 %v1200, 7
        %v1202 = vsub.s32 5, %v1201
        %v1203 = vrot.slane %v331, %v1202
        %v1204 = vmul.f32 %v1184, %v1203
        %v1205 = vmul.f32 %v1185, %v1203
        %v1206 = vmul.f32 %v1186, %v1203
        %v1207 = vmul.f32 %v1187, %v1203
        %v1208 = vmul.f32 %v1188, %v1203
        %v1209 = vmul.f32 %v1189, %v1203
        %v1210 = vmul.f32 %v1190, %v1203
        %v1211 = vmul.f32 %v1191, %v1203
        %v1212 = vmul.f32 %v1192, %v1203
        %v1213 = vmul.f32 %v1193, %v1203
        %v1214 = vmul.f32 %v1194, %v1203
        %v1215 = vmul.f32 %v1195, %v1203
        %v1216 = vmul.f32 %v1196, %v1203
        %v1217 = vmul.f32 %v1197, %v1203
        %v1218 = vmul.f32 %v1198, %v1203
        %v1219 = vmul.f32 %v1199, %v1203
        %v1220 = vlaneseq
        %v1221 = vshrl.u32 %v1220, 7
        %v1222 = vsub.s32 1, %v1221
        %v1223 = vrot.slane %v332, %v1222
        %v1224 = vadd.f32 %v1204, %v1223
        %v1225 = vadd.f32 %v1205, %v1223
        %v1226 = vadd.f32 %v1206, %v1223
        %v1227 = vadd.f32 %v1207, %v1223
        %v1228 = vadd.f32 %v1208, %v1223
        %v1229 = vadd.f32 %v1209, %v1223
        %v1230 = vadd.f32 %v1210, %v1223
        %v1231 = vadd.f32 %v1211, %v1223
        %v1232 = vadd.f32 %v1212, %v1223
        %v1233 = vadd.f32 %v1213, %v1223
        %v1234 = vadd.f32 %v1214, %v1223
        %v1235 = vadd.f32 %v1215, %v1223
        %v1236 = vadd.f32 %v1216, %v1223
        %v1237 = vadd.f32 %v1217, %v1223
        %v1238 = vadd.f32 %v1218, %v1223
        %v1239 = vadd.f32 %v1219, %v1223
        %v1240 = vmax.f32 %v1224, 0.0
        %v1241 = vmax.f32 %v1225, 0.0
        %v1242 = vmax.f32 %v1226, 0.0
        %v1243 = vmax.f32 %v1227, 0.0
        %v1244 = vmax.f32 %v1228, 0.0
        %v1245 = vmax.f32 %v1229, 0.0
        %v1246 = vmax.f32 %v1230, 0.0
        %v1247 = vmax.f32 %v1231, 0.0
        %v1248 = vmax.f32 %v1232, 0.0
        %v1249 = vmax.f32 %v1233, 0.0
        %v1250 = vmax.f32 %v1234, 0.0
        %v1251 = vmax.f32 %v1235, 0.0
        %v1252 = vmax.f32 %v1236, 0.0
        %v1253 = vmax.f32 %v1237, 0.0
        %v1254 = vmax.f32 %v1238, 0.0
        %v1255 = vmax.f32 %v1239, 0.0
        %v1256 = vpack.c.bf16 %v1241, %v1240
        %v1257 = vpack.c.bf16 %v1243, %v1242
        %v1258 = vpack.c.bf16 %v1245, %v1244
        %v1259 = vpack.c.bf16 %v1247, %v1246
        %v1260 = vpack.c.bf16 %v1249, %v1248
        %v1261 = vpack.c.bf16 %v1251, %v1250
        %v1262 = vpack.c.bf16 %v1253, %v1252
        %v1263 = vpack.c.bf16 %v1255, %v1254
        %s1264 = scalar_lea.vmem [#allocation7], 64
        %v1265 = vld [vmem:[%s1264] sm:$0xf]
        %v1266 = vld [vmem:[%s1264 + $0x4] sm:$0xf]
        %v1267 = vld [vmem:[%s1264 + $0x8] sm:$0xf]
        %v1268 = vld [vmem:[%s1264 + $0xc] sm:$0xf]
        %v1269 = vld [vmem:[%s1264 + $0x10] sm:$0xf]
        %v1270 = vld [vmem:[%s1264 + $0x14] sm:$0xf]
        %v1271 = vld [vmem:[%s1264 + $0x18] sm:$0xf]
        %v1272 = vld [vmem:[%s1264 + $0x1c] sm:$0xf]
        %v1273 = vld [vmem:[%s1264 + $0x20] sm:$0xf]
        %v1274 = vld [vmem:[%s1264 + $0x24] sm:$0xf]
        %v1275 = vld [vmem:[%s1264 + $0x28] sm:$0xf]
        %v1276 = vld [vmem:[%s1264 + $0x2c] sm:$0xf]
        %v1277 = vld [vmem:[%s1264 + $0x30] sm:$0xf]
        %v1278 = vld [vmem:[%s1264 + $0x34] sm:$0xf]
        %v1279 = vld [vmem:[%s1264 + $0x38] sm:$0xf]
        %v1280 = vld [vmem:[%s1264 + $0x3c] sm:$0xf]
        %v1281 = vlaneseq
        %v1282 = vshrl.u32 %v1281, 7
        %v1283 = vsub.s32 2, %v1282
        %v1284 = vrot.slane %v331, %v1283
        %v1301 = vunpack.c.l.b16 %v1265
        %v1302 = vunpack.c.l.b16 %v1266
        %v1303 = vunpack.c.l.b16 %v1267
        %v1304 = vunpack.c.l.b16 %v1268
        %v1305 = vunpack.c.l.b16 %v1269
        %v1306 = vunpack.c.l.b16 %v1270
        %v1307 = vunpack.c.l.b16 %v1271
        %v1308 = vunpack.c.l.b16 %v1272
        %v1309 = vunpack.c.l.b16 %v1273
        %v1310 = vunpack.c.l.b16 %v1274
        %v1311 = vunpack.c.l.b16 %v1275
        %v1312 = vunpack.c.l.b16 %v1276
        %v1313 = vunpack.c.l.b16 %v1277
        %v1314 = vunpack.c.l.b16 %v1278
        %v1315 = vunpack.c.l.b16 %v1279
        %v1316 = vunpack.c.l.b16 %v1280
        %v1317 = vpack.c.b16 %v1302, %v1301
        %v1318 = vpack.c.b16 %v1304, %v1303
        %v1319 = vpack.c.b16 %v1306, %v1305
        %v1320 = vpack.c.b16 %v1308, %v1307
        %v1321 = vpack.c.b16 %v1310, %v1309
        %v1322 = vpack.c.b16 %v1312, %v1311
        %v1323 = vpack.c.b16 %v1314, %v1313
        %v1324 = vpack.c.b16 %v1316, %v1315
        %1333 = vmatprep.subr.bf16.mxu0 0
        %1334 = vmatpush1.bf16.msra.mxu0 %v1317
        %1335 = vmatprep.subr.bf16.mxu0 0
        %1336 = vmatpush1.bf16.msra.mxu0 %v1318
        %1337 = vmatprep.subr.bf16.mxu0 0
        %1338 = vmatpush1.bf16.msra.mxu0 %v1319
        %1339 = vmatprep.subr.bf16.mxu0 0
        %1340 = vmatpush1.bf16.msra.mxu0 %v1320
        %1341 = vmatprep.subr.bf16.mxu0 0
        %1342 = vmatpush1.bf16.msra.mxu0 %v1321
        %1343 = vmatprep.subr.bf16.mxu0 0
        %1344 = vmatpush1.bf16.msra.mxu0 %v1322
        %1345 = vmatprep.subr.bf16.mxu0 0
        %1346 = vmatpush1.bf16.msra.mxu0 %v1323
        %1347 = vmatprep.subr.bf16.mxu0 0
        %1348 = vmatpush1.bf16.msra.mxu0 %v1324
        %1349 = vmatprep.subr.bf16.mxu0 0
        %1350 = vmatpush1.bf16.msra.mxu0 0
        %1351 = vmatprep.subr.bf16.mxu0 0
        %1352 = vmatpush1.bf16.msra.mxu0 0
        %1353 = vmatprep.subr.bf16.mxu0 0
        %1354 = vmatpush1.bf16.msra.mxu0 0
        %1355 = vmatprep.subr.bf16.mxu0 0
        %1356 = vmatpush1.bf16.msra.mxu0 0
        %1357 = vmatprep.subr.bf16.mxu0 0
        %1358 = vmatpush1.bf16.msra.mxu0 0
        %1359 = vmatprep.subr.bf16.mxu0 0
        %1360 = vmatpush1.bf16.msra.mxu0 0
        %1361 = vmatprep.subr.bf16.mxu0 0
        %1362 = vmatpush1.bf16.msra.mxu0 0
        %1363 = vmatprep.subr.bf16.mxu0 0
        %1364 = vmatpush1.bf16.msra.mxu0 0
        %1365 = vmatprep.mubr.bf16.mxu0 0
        %1366 = vmatmul.mubr.bf16.gmra.mrb[0].mxu0 %v1256
        %v1367 = vpop.f32.mrb[0].mxu0
        %v1368 = vadd.f32 %v1284, %v1367
        %v1369 = vpop.f32.mrb[0].mxu0
        %v1370 = vpop.f32.mrb[0].mxu0
        %v1371 = vadd.f32 %v1284, %v1370
        %v1372 = vpop.f32.mrb[0].mxu0
        %1373 = vmatprep.mubr.bf16.mxu0 0
        %1374 = vmatmul.mubr.bf16.gmra.mrb[0].mxu0 %v1257
        %v1375 = vpop.f32.mrb[0].mxu0
        %v1376 = vadd.f32 %v1284, %v1375
        %v1377 = vpop.f32.mrb[0].mxu0
        %v1378 = vpop.f32.mrb[0].mxu0
        %v1379 = vadd.f32 %v1284, %v1378
        %v1380 = vpop.f32.mrb[0].mxu0
        %1381 = vmatprep.mubr.bf16.mxu0 0
        %1382 = vmatmul.mubr.bf16.gmra.mrb[0].mxu0 %v1258
        %v1383 = vpop.f32.mrb[0].mxu0
        %v1384 = vadd.f32 %v1284, %v1383
        %v1385 = vpop.f32.mrb[0].mxu0
        %v1386 = vpop.f32.mrb[0].mxu0
        %v1387 = vadd.f32 %v1284, %v1386
        %v1388 = vpop.f32.mrb[0].mxu0
        %1389 = vmatprep.mubr.bf16.mxu0 0
        %1390 = vmatmul.mubr.bf16.gmra.mrb[0].mxu0 %v1259
        %v1391 = vpop.f32.mrb[0].mxu0
        %v1392 = vadd.f32 %v1284, %v1391
        %v1393 = vpop.f32.mrb[0].mxu0
        %v1394 = vpop.f32.mrb[0].mxu0
        %v1395 = vadd.f32 %v1284, %v1394
        %v1396 = vpop.f32.mrb[0].mxu0
        %1397 = vmatprep.mubr.bf16.mxu0 0
        %1398 = vmatmul.mubr.bf16.gmra.mrb[0].mxu0 %v1260
        %v1399 = vpop.f32.mrb[0].mxu0
        %v1400 = vadd.f32 %v1284, %v1399
        %v1401 = vpop.f32.mrb[0].mxu0
        %v1402 = vpop.f32.mrb[0].mxu0
        %v1403 = vadd.f32 %v1284, %v1402
        %v1404 = vpop.f32.mrb[0].mxu0
        %1405 = vmatprep.mubr.bf16.mxu0 0
        %1406 = vmatmul.mubr.bf16.gmra.mrb[0].mxu0 %v1261
        %v1407 = vpop.f32.mrb[0].mxu0
        %v1408 = vadd.f32 %v1284, %v1407
        %v1409 = vpop.f32.mrb[0].mxu0
        %v1410 = vpop.f32.mrb[0].mxu0
        %v1411 = vadd.f32 %v1284, %v1410
        %v1412 = vpop.f32.mrb[0].mxu0
        %1413 = vmatprep.mubr.bf16.mxu0 0
        %1414 = vmatmul.mubr.bf16.gmra.mrb[0].mxu0 %v1262
        %v1415 = vpop.f32.mrb[0].mxu0
        %v1416 = vadd.f32 %v1284, %v1415
        %v1417 = vpop.f32.mrb[0].mxu0
        %v1418 = vpop.f32.mrb[0].mxu0
        %v1419 = vadd.f32 %v1284, %v1418
        %v1420 = vpop.f32.mrb[0].mxu0
        %1421 = vmatprep.mubr.bf16.mxu0 0
        %1422 = vmatmul.mubr.bf16.gmra.mrb[0].mxu0 %v1263
        %v1423 = vpop.f32.mrb[0].mxu0
        %v1424 = vadd.f32 %v1284, %v1423
        %v1425 = vpop.f32.mrb[0].mxu0
        %v1426 = vpop.f32.mrb[0].mxu0
        %v1427 = vadd.f32 %v1284, %v1426
        %v1428 = vpop.f32.mrb[0].mxu0
        %1429 = vdwg.mxu0
        %1430 = vadd.xlane.f32.xlu0 %v1368
        %v1431 = vpop.xlane.xlu0 %1430
        %1432 = vadd.xlane.f32.xlu0 %v1371
        %v1433 = vpop.xlane.xlu0 %1432
        %1434 = vadd.xlane.f32.xlu0 %v1376
        %v1435 = vpop.xlane.xlu0 %1434
        %1436 = vadd.xlane.f32.xlu0 %v1379
        %v1437 = vpop.xlane.xlu0 %1436
        %1438 = vadd.xlane.f32.xlu0 %v1384
        %v1439 = vpop.xlane.xlu0 %1438
        %1440 = vadd.xlane.f32.xlu0 %v1387
        %v1441 = vpop.xlane.xlu0 %1440
        %1442 = vadd.xlane.f32.xlu0 %v1392
        %v1443 = vpop.xlane.xlu0 %1442
        %1444 = vadd.xlane.f32.xlu0 %v1395
        %v1445 = vpop.xlane.xlu0 %1444
        %1446 = vadd.xlane.f32.xlu0 %v1400
        %v1447 = vpop.xlane.xlu0 %1446
        %1448 = vadd.xlane.f32.xlu0 %v1403
        %v1449 = vpop.xlane.xlu0 %1448
        %1450 = vadd.xlane.f32.xlu0 %v1408
        %v1451 = vpop.xlane.xlu0 %1450
        %1452 = vadd.xlane.f32.xlu0 %v1411
        %v1453 = vpop.xlane.xlu0 %1452
        %1454 = vadd.xlane.f32.xlu0 %v1416
        %v1455 = vpop.xlane.xlu0 %1454
        %1456 = vadd.xlane.f32.xlu0 %v1419
        %v1457 = vpop.xlane.xlu0 %1456
        %1458 = vadd.xlane.f32.xlu0 %v1424
        %v1459 = vpop.xlane.xlu0 %1458
        %1460 = vadd.xlane.f32.xlu0 %v1427
        %v1461 = vpop.xlane.xlu0 %1460
        %v1462 = vmul.f32 %v1368, %v1368
        %v1463 = vmul.f32 %v1371, %v1371
        %v1464 = vmul.f32 %v1376, %v1376
        %v1465 = vmul.f32 %v1379, %v1379
        %v1466 = vmul.f32 %v1384, %v1384
        %v1467 = vmul.f32 %v1387, %v1387
        %v1468 = vmul.f32 %v1392, %v1392
        %v1469 = vmul.f32 %v1395, %v1395
        %v1470 = vmul.f32 %v1400, %v1400
        %v1471 = vmul.f32 %v1403, %v1403
        %v1472 = vmul.f32 %v1408, %v1408
        %v1473 = vmul.f32 %v1411, %v1411
        %v1474 = vmul.f32 %v1416, %v1416
        %v1475 = vmul.f32 %v1419, %v1419
        %v1476 = vmul.f32 %v1424, %v1424
        %v1477 = vmul.f32 %v1427, %v1427
        %1478 = vadd.xlane.f32.xlu0 %v1462
        %v1479 = vpop.xlane.xlu0 %1478
        %1480 = vadd.xlane.f32.xlu0 %v1463
        %v1481 = vpop.xlane.xlu0 %1480
        %1482 = vadd.xlane.f32.xlu0 %v1464
        %v1483 = vpop.xlane.xlu0 %1482
        %1484 = vadd.xlane.f32.xlu0 %v1465
        %v1485 = vpop.xlane.xlu0 %1484
        %1486 = vadd.xlane.f32.xlu0 %v1466
        %v1487 = vpop.xlane.xlu0 %1486
        %1488 = vadd.xlane.f32.xlu0 %v1467
        %v1489 = vpop.xlane.xlu0 %1488
        %1490 = vadd.xlane.f32.xlu0 %v1468
        %v1491 = vpop.xlane.xlu0 %1490
        %1492 = vadd.xlane.f32.xlu0 %v1469
        %v1493 = vpop.xlane.xlu0 %1492
        %1494 = vadd.xlane.f32.xlu0 %v1470
        %v1495 = vpop.xlane.xlu0 %1494
        %1496 = vadd.xlane.f32.xlu0 %v1471
        %v1497 = vpop.xlane.xlu0 %1496
        %1498 = vadd.xlane.f32.xlu0 %v1472
        %v1499 = vpop.xlane.xlu0 %1498
        %1500 = vadd.xlane.f32.xlu0 %v1473
        %v1501 = vpop.xlane.xlu0 %1500
        %1502 = vadd.xlane.f32.xlu0 %v1474
        %v1503 = vpop.xlane.xlu0 %1502
        %1504 = vadd.xlane.f32.xlu0 %v1475
        %v1505 = vpop.xlane.xlu0 %1504
        %1506 = vadd.xlane.f32.xlu0 %v1476
        %v1507 = vpop.xlane.xlu0 %1506
        %1508 = vadd.xlane.f32.xlu0 %v1477
        %v1509 = vpop.xlane.xlu0 %1508
        %v1510 = vmul.f32 %v1431, 0.0078125
        %v1511 = vmul.f32 %v1433, 0.0078125
        %v1512 = vmul.f32 %v1435, 0.0078125
        %v1513 = vmul.f32 %v1437, 0.0078125
        %v1514 = vmul.f32 %v1439, 0.0078125
        %v1515 = vmul.f32 %v1441, 0.0078125
        %v1516 = vmul.f32 %v1443, 0.0078125
        %v1517 = vmul.f32 %v1445, 0.0078125
        %v1518 = vmul.f32 %v1447, 0.0078125
        %v1519 = vmul.f32 %v1449, 0.0078125
        %v1520 = vmul.f32 %v1451, 0.0078125
        %v1521 = vmul.f32 %v1453, 0.0078125
        %v1522 = vmul.f32 %v1455, 0.0078125
        %v1523 = vmul.f32 %v1457, 0.0078125
        %v1524 = vmul.f32 %v1459, 0.0078125
        %v1525 = vmul.f32 %v1461, 0.0078125
        %v1526 = vmul.f32 %v1479, 0.0078125
        %v1527 = vmul.f32 %v1481, 0.0078125
        %v1528 = vmul.f32 %v1483, 0.0078125
        %v1529 = vmul.f32 %v1485, 0.0078125
        %v1530 = vmul.f32 %v1487, 0.0078125
        %v1531 = vmul.f32 %v1489, 0.0078125
        %v1532 = vmul.f32 %v1491, 0.0078125
        %v1533 = vmul.f32 %v1493, 0.0078125
        %v1534 = vmul.f32 %v1495, 0.0078125
        %v1535 = vmul.f32 %v1497, 0.0078125
        %v1536 = vmul.f32 %v1499, 0.0078125
        %v1537 = vmul.f32 %v1501, 0.0078125
        %v1538 = vmul.f32 %v1503, 0.0078125
        %v1539 = vmul.f32 %v1505, 0.0078125
        %v1540 = vmul.f32 %v1507, 0.0078125
        %v1541 = vmul.f32 %v1509, 0.0078125
        %v1542 = vmul.f32 %v1510, %v1510
        %v1543 = vmul.f32 %v1511, %v1511
        %v1544 = vmul.f32 %v1512, %v1512
        %v1545 = vmul.f32 %v1513, %v1513
        %v1546 = vmul.f32 %v1514, %v1514
        %v1547 = vmul.f32 %v1515, %v1515
        %v1548 = vmul.f32 %v1516, %v1516
        %v1549 = vmul.f32 %v1517, %v1517
        %v1550 = vmul.f32 %v1518, %v1518
        %v1551 = vmul.f32 %v1519, %v1519
        %v1552 = vmul.f32 %v1520, %v1520
        %v1553 = vmul.f32 %v1521, %v1521
        %v1554 = vmul.f32 %v1522, %v1522
        %v1555 = vmul.f32 %v1523, %v1523
        %v1556 = vmul.f32 %v1524, %v1524
        %v1557 = vmul.f32 %v1525, %v1525
        %v1558 = vsub.f32 %v1526, %v1542
        %v1559 = vsub.f32 %v1527, %v1543
        %v1560 = vsub.f32 %v1528, %v1544
        %v1561 = vsub.f32 %v1529, %v1545
        %v1562 = vsub.f32 %v1530, %v1546
        %v1563 = vsub.f32 %v1531, %v1547
        %v1564 = vsub.f32 %v1532, %v1548
        %v1565 = vsub.f32 %v1533, %v1549
        %v1566 = vsub.f32 %v1534, %v1550
        %v1567 = vsub.f32 %v1535, %v1551
        %v1568 = vsub.f32 %v1536, %v1552
        %v1569 = vsub.f32 %v1537, %v1553
        %v1570 = vsub.f32 %v1538, %v1554
        %v1571 = vsub.f32 %v1539, %v1555
        %v1572 = vsub.f32 %v1540, %v1556
        %v1573 = vsub.f32 %v1541, %v1557
        %v1574 = vmax.f32 %v1558, 0.0
        %v1575 = vmax.f32 %v1559, 0.0
        %v1576 = vmax.f32 %v1560, 0.0
        %v1577 = vmax.f32 %v1561, 0.0
        %v1578 = vmax.f32 %v1562, 0.0
        %v1579 = vmax.f32 %v1563, 0.0
        %v1580 = vmax.f32 %v1564, 0.0
        %v1581 = vmax.f32 %v1565, 0.0
        %v1582 = vmax.f32 %v1566, 0.0
        %v1583 = vmax.f32 %v1567, 0.0
        %v1584 = vmax.f32 %v1568, 0.0
        %v1585 = vmax.f32 %v1569, 0.0
        %v1586 = vmax.f32 %v1570, 0.0
        %v1587 = vmax.f32 %v1571, 0.0
        %v1588 = vmax.f32 %v1572, 0.0
        %v1589 = vmax.f32 %v1573, 0.0
        %v1590 = vadd.f32 %v1574, 1e-05
        %v1591 = vadd.f32 %v1575, 1e-05
        %v1592 = vadd.f32 %v1576, 1e-05
        %v1593 = vadd.f32 %v1577, 1e-05
        %v1594 = vadd.f32 %v1578, 1e-05
        %v1595 = vadd.f32 %v1579, 1e-05
        %v1596 = vadd.f32 %v1580, 1e-05
        %v1597 = vadd.f32 %v1581, 1e-05
        %v1598 = vadd.f32 %v1582, 1e-05
        %v1599 = vadd.f32 %v1583, 1e-05
        %v1600 = vadd.f32 %v1584, 1e-05
        %v1601 = vadd.f32 %v1585, 1e-05
        %v1602 = vadd.f32 %v1586, 1e-05
        %v1603 = vadd.f32 %v1587, 1e-05
        %v1604 = vadd.f32 %v1588, 1e-05
        %v1605 = vadd.f32 %v1589, 1e-05
        %v1606 = vrsqrt.pop %v1590
        %v1607 = vrsqrt.pop %v1591
        %v1608 = vrsqrt.pop %v1592
        %v1609 = vrsqrt.pop %v1593
        %v1610 = vrsqrt.pop %v1594
        %v1611 = vrsqrt.pop %v1595
        %v1612 = vrsqrt.pop %v1596
        %v1613 = vrsqrt.pop %v1597
        %v1614 = vrsqrt.pop %v1598
        %v1615 = vrsqrt.pop %v1599
        %v1616 = vrsqrt.pop %v1600
        %v1617 = vrsqrt.pop %v1601
        %v1618 = vrsqrt.pop %v1602
        %v1619 = vrsqrt.pop %v1603
        %v1620 = vrsqrt.pop %v1604
        %v1621 = vrsqrt.pop %v1605
        %v1622 = vsub.f32 %v1368, %v1510
        %v1623 = vsub.f32 %v1371, %v1511
        %v1624 = vsub.f32 %v1376, %v1512
        %v1625 = vsub.f32 %v1379, %v1513
        %v1626 = vsub.f32 %v1384, %v1514
        %v1627 = vsub.f32 %v1387, %v1515
        %v1628 = vsub.f32 %v1392, %v1516
        %v1629 = vsub.f32 %v1395, %v1517
        %v1630 = vsub.f32 %v1400, %v1518
        %v1631 = vsub.f32 %v1403, %v1519
        %v1632 = vsub.f32 %v1408, %v1520
        %v1633 = vsub.f32 %v1411, %v1521
        %v1634 = vsub.f32 %v1416, %v1522
        %v1635 = vsub.f32 %v1419, %v1523
        %v1636 = vsub.f32 %v1424, %v1524
        %v1637 = vsub.f32 %v1427, %v1525
        %v1638 = vmul.f32 %v1622, %v1606
        %v1639 = vmul.f32 %v1623, %v1607
        %v1640 = vmul.f32 %v1624, %v1608
        %v1641 = vmul.f32 %v1625, %v1609
        %v1642 = vmul.f32 %v1626, %v1610
        %v1643 = vmul.f32 %v1627, %v1611
        %v1644 = vmul.f32 %v1628, %v1612
        %v1645 = vmul.f32 %v1629, %v1613
        %v1646 = vmul.f32 %v1630, %v1614
        %v1647 = vmul.f32 %v1631, %v1615
        %v1648 = vmul.f32 %v1632, %v1616
        %v1649 = vmul.f32 %v1633, %v1617
        %v1650 = vmul.f32 %v1634, %v1618
        %v1651 = vmul.f32 %v1635, %v1619
        %v1652 = vmul.f32 %v1636, %v1620
        %v1653 = vmul.f32 %v1637, %v1621
        %v1654 = vlaneseq
        %v1655 = vshrl.u32 %v1654, 7
        %v1656 = vsub.s32 6, %v1655
        %v1657 = vrot.slane %v331, %v1656
        %v1658 = vmul.f32 %v1638, %v1657
        %v1659 = vmul.f32 %v1639, %v1657
        %v1660 = vmul.f32 %v1640, %v1657
        %v1661 = vmul.f32 %v1641, %v1657
        %v1662 = vmul.f32 %v1642, %v1657
        %v1663 = vmul.f32 %v1643, %v1657
        %v1664 = vmul.f32 %v1644, %v1657
        %v1665 = vmul.f32 %v1645, %v1657
        %v1666 = vmul.f32 %v1646, %v1657
        %v1667 = vmul.f32 %v1647, %v1657
        %v1668 = vmul.f32 %v1648, %v1657
        %v1669 = vmul.f32 %v1649, %v1657
        %v1670 = vmul.f32 %v1650, %v1657
        %v1671 = vmul.f32 %v1651, %v1657
        %v1672 = vmul.f32 %v1652, %v1657
        %v1673 = vmul.f32 %v1653, %v1657
        %v1674 = vlaneseq
        %v1675 = vshrl.u32 %v1674, 7
        %v1676 = vsub.s32 2, %v1675
        %v1677 = vrot.slane %v332, %v1676
        %v1678 = vadd.f32 %v1658, %v1677
        %v1679 = vadd.f32 %v1659, %v1677
        %v1680 = vadd.f32 %v1660, %v1677
        %v1681 = vadd.f32 %v1661, %v1677
        %v1682 = vadd.f32 %v1662, %v1677
        %v1683 = vadd.f32 %v1663, %v1677
        %v1684 = vadd.f32 %v1664, %v1677
        %v1685 = vadd.f32 %v1665, %v1677
        %v1686 = vadd.f32 %v1666, %v1677
        %v1687 = vadd.f32 %v1667, %v1677
        %v1688 = vadd.f32 %v1668, %v1677
        %v1689 = vadd.f32 %v1669, %v1677
        %v1690 = vadd.f32 %v1670, %v1677
        %v1691 = vadd.f32 %v1671, %v1677
        %v1692 = vadd.f32 %v1672, %v1677
        %v1693 = vadd.f32 %v1673, %v1677
        %v1694 = vmax.f32 %v1678, 0.0
        %v1695 = vmax.f32 %v1679, 0.0
        %v1696 = vmax.f32 %v1680, 0.0
        %v1697 = vmax.f32 %v1681, 0.0
        %v1698 = vmax.f32 %v1682, 0.0
        %v1699 = vmax.f32 %v1683, 0.0
        %v1700 = vmax.f32 %v1684, 0.0
        %v1701 = vmax.f32 %v1685, 0.0
        %v1702 = vmax.f32 %v1686, 0.0
        %v1703 = vmax.f32 %v1687, 0.0
        %v1704 = vmax.f32 %v1688, 0.0
        %v1705 = vmax.f32 %v1689, 0.0
        %v1706 = vmax.f32 %v1690, 0.0
        %v1707 = vmax.f32 %v1691, 0.0
        %v1708 = vmax.f32 %v1692, 0.0
        %v1709 = vmax.f32 %v1693, 0.0
        %v1710 = vpack.c.bf16 %v1695, %v1694
        %v1711 = vpack.c.bf16 %v1697, %v1696
        %v1712 = vpack.c.bf16 %v1699, %v1698
        %v1713 = vpack.c.bf16 %v1701, %v1700
        %v1714 = vpack.c.bf16 %v1703, %v1702
        %v1715 = vpack.c.bf16 %v1705, %v1704
        %v1716 = vpack.c.bf16 %v1707, %v1706
        %v1717 = vpack.c.bf16 %v1709, %v1708
        %s1718 = scalar_lea.vmem [#allocation7], 128
        %v1719 = vld [vmem:[%s1718] sm:$0xf]
        %v1720 = vld [vmem:[%s1718 + $0x4] sm:$0xf]
        %v1721 = vld [vmem:[%s1718 + $0x8] sm:$0xf]
        %v1722 = vld [vmem:[%s1718 + $0xc] sm:$0xf]
        %v1723 = vld [vmem:[%s1718 + $0x10] sm:$0xf]
        %v1724 = vld [vmem:[%s1718 + $0x14] sm:$0xf]
        %v1725 = vld [vmem:[%s1718 + $0x18] sm:$0xf]
        %v1726 = vld [vmem:[%s1718 + $0x1c] sm:$0xf]
        %v1727 = vld [vmem:[%s1718 + $0x20] sm:$0xf]
        %v1728 = vld [vmem:[%s1718 + $0x24] sm:$0xf]
        %v1729 = vld [vmem:[%s1718 + $0x28] sm:$0xf]
        %v1730 = vld [vmem:[%s1718 + $0x2c] sm:$0xf]
        %v1731 = vld [vmem:[%s1718 + $0x30] sm:$0xf]
        %v1732 = vld [vmem:[%s1718 + $0x34] sm:$0xf]
        %v1733 = vld [vmem:[%s1718 + $0x38] sm:$0xf]
        %v1734 = vld [vmem:[%s1718 + $0x3c] sm:$0xf]
        %v1735 = vlaneseq
        %v1736 = vshrl.u32 %v1735, 7
        %v1737 = vsub.s32 3, %v1736
        %v1738 = vrot.slane %v331, %v1737
        %v1755 = vunpack.c.l.b16 %v1719
        %v1756 = vunpack.c.l.b16 %v1720
        %v1757 = vunpack.c.l.b16 %v1721
        %v1758 = vunpack.c.l.b16 %v1722
        %v1759 = vunpack.c.l.b16 %v1723
        %v1760 = vunpack.c.l.b16 %v1724
        %v1761 = vunpack.c.l.b16 %v1725
        %v1762 = vunpack.c.l.b16 %v1726
        %v1763 = vunpack.c.l.b16 %v1727
        %v1764 = vunpack.c.l.b16 %v1728
        %v1765 = vunpack.c.l.b16 %v1729
        %v1766 = vunpack.c.l.b16 %v1730
        %v1767 = vunpack.c.l.b16 %v1731
        %v1768 = vunpack.c.l.b16 %v1732
        %v1769 = vunpack.c.l.b16 %v1733
        %v1770 = vunpack.c.l.b16 %v1734
        %v1771 = vpack.c.b16 %v1756, %v1755
        %v1772 = vpack.c.b16 %v1758, %v1757
        %v1773 = vpack.c.b16 %v1760, %v1759
        %v1774 = vpack.c.b16 %v1762, %v1761
        %v1775 = vpack.c.b16 %v1764, %v1763
        %v1776 = vpack.c.b16 %v1766, %v1765
        %v1777 = vpack.c.b16 %v1768, %v1767
        %v1778 = vpack.c.b16 %v1770, %v1769
        %1787 = vmatprep.subr.bf16.mxu0 0
        %1788 = vmatpush1.bf16.msra.mxu0 %v1771
        %1789 = vmatprep.subr.bf16.mxu0 0
        %1790 = vmatpush1.bf16.msra.mxu0 %v1772
        %1791 = vmatprep.subr.bf16.mxu0 0
        %1792 = vmatpush1.bf16.msra.mxu0 %v1773
        %1793 = vmatprep.subr.bf16.mxu0 0
        %1794 = vmatpush1.bf16.msra.mxu0 %v1774
        %1795 = vmatprep.subr.bf16.mxu0 0
        %1796 = vmatpush1.bf16.msra.mxu0 %v1775
        %1797 = vmatprep.subr.bf16.mxu0 0
        %1798 = vmatpush1.bf16.msra.mxu0 %v1776
        %1799 = vmatprep.subr.bf16.mxu0 0
        %1800 = vmatpush1.bf16.msra.mxu0 %v1777
        %1801 = vmatprep.subr.bf16.mxu0 0
        %1802 = vmatpush1.bf16.msra.mxu0 %v1778
        %1803 = vmatprep.subr.bf16.mxu0 0
        %1804 = vmatpush1.bf16.msra.mxu0 0
        %1805 = vmatprep.subr.bf16.mxu0 0
        %1806 = vmatpush1.bf16.msra.mxu0 0
        %1807 = vmatprep.subr.bf16.mxu0 0
        %1808 = vmatpush1.bf16.msra.mxu0 0
        %1809 = vmatprep.subr.bf16.mxu0 0
        %1810 = vmatpush1.bf16.msra.mxu0 0
        %1811 = vmatprep.subr.bf16.mxu0 0
        %1812 = vmatpush1.bf16.msra.mxu0 0
        %1813 = vmatprep.subr.bf16.mxu0 0
        %1814 = vmatpush1.bf16.msra.mxu0 0
        %1815 = vmatprep.subr.bf16.mxu0 0
        %1816 = vmatpush1.bf16.msra.mxu0 0
        %1817 = vmatprep.subr.bf16.mxu0 0
        %1818 = vmatpush1.bf16.msra.mxu0 0
        %1819 = vmatprep.mubr.bf16.mxu0 0
        %1820 = vmatmul.mubr.bf16.gmra.mrb[0].mxu0 %v1710
        %v1821 = vpop.f32.mrb[0].mxu0
        %v1822 = vadd.f32 %v1738, %v1821
        %v1823 = vpop.f32.mrb[0].mxu0
        %v1824 = vpop.f32.mrb[0].mxu0
        %v1825 = vadd.f32 %v1738, %v1824
        %v1826 = vpop.f32.mrb[0].mxu0
        %1827 = vmatprep.mubr.bf16.mxu0 0
        %1828 = vmatmul.mubr.bf16.gmra.mrb[0].mxu0 %v1711
        %v1829 = vpop.f32.mrb[0].mxu0
        %v1830 = vadd.f32 %v1738, %v1829
        %v1831 = vpop.f32.mrb[0].mxu0
        %v1832 = vpop.f32.mrb[0].mxu0
        %v1833 = vadd.f32 %v1738, %v1832
        %v1834 = vpop.f32.mrb[0].mxu0
        %1835 = vmatprep.mubr.bf16.mxu0 0
        %1836 = vmatmul.mubr.bf16.gmra.mrb[0].mxu0 %v1712
        %v1837 = vpop.f32.mrb[0].mxu0
        %v1838 = vadd.f32 %v1738, %v1837
        %v1839 = vpop.f32.mrb[0].mxu0
        %v1840 = vpop.f32.mrb[0].mxu0
        %v1841 = vadd.f32 %v1738, %v1840
        %v1842 = vpop.f32.mrb[0].mxu0
        %1843 = vmatprep.mubr.bf16.mxu0 0
        %1844 = vmatmul.mubr.bf16.gmra.mrb[0].mxu0 %v1713
        %v1845 = vpop.f32.mrb[0].mxu0
        %v1846 = vadd.f32 %v1738, %v1845
        %v1847 = vpop.f32.mrb[0].mxu0
        %v1848 = vpop.f32.mrb[0].mxu0
        %v1849 = vadd.f32 %v1738, %v1848
        %v1850 = vpop.f32.mrb[0].mxu0
        %1851 = vmatprep.mubr.bf16.mxu0 0
        %1852 = vmatmul.mubr.bf16.gmra.mrb[0].mxu0 %v1714
        %v1853 = vpop.f32.mrb[0].mxu0
        %v1854 = vadd.f32 %v1738, %v1853
        %v1855 = vpop.f32.mrb[0].mxu0
        %v1856 = vpop.f32.mrb[0].mxu0
        %v1857 = vadd.f32 %v1738, %v1856
        %v1858 = vpop.f32.mrb[0].mxu0
        %1859 = vmatprep.mubr.bf16.mxu0 0
        %1860 = vmatmul.mubr.bf16.gmra.mrb[0].mxu0 %v1715
        %v1861 = vpop.f32.mrb[0].mxu0
        %v1862 = vadd.f32 %v1738, %v1861
        %v1863 = vpop.f32.mrb[0].mxu0
        %v1864 = vpop.f32.mrb[0].mxu0
        %v1865 = vadd.f32 %v1738, %v1864
        %v1866 = vpop.f32.mrb[0].mxu0
        %1867 = vmatprep.mubr.bf16.mxu0 0
        %1868 = vmatmul.mubr.bf16.gmra.mrb[0].mxu0 %v1716
        %v1869 = vpop.f32.mrb[0].mxu0
        %v1870 = vadd.f32 %v1738, %v1869
        %v1871 = vpop.f32.mrb[0].mxu0
        %v1872 = vpop.f32.mrb[0].mxu0
        %v1873 = vadd.f32 %v1738, %v1872
        %v1874 = vpop.f32.mrb[0].mxu0
        %1875 = vmatprep.mubr.bf16.mxu0 0
        %1876 = vmatmul.mubr.bf16.gmra.mrb[0].mxu0 %v1717
        %v1877 = vpop.f32.mrb[0].mxu0
        %v1878 = vadd.f32 %v1738, %v1877
        %v1879 = vpop.f32.mrb[0].mxu0
        %v1880 = vpop.f32.mrb[0].mxu0
        %v1881 = vadd.f32 %v1738, %v1880
        %v1882 = vpop.f32.mrb[0].mxu0
        %1883 = vdwg.mxu0
        %1884 = vadd.xlane.f32.xlu0 %v1822
        %v1885 = vpop.xlane.xlu0 %1884
        %1886 = vadd.xlane.f32.xlu0 %v1825
        %v1887 = vpop.xlane.xlu0 %1886
        %1888 = vadd.xlane.f32.xlu0 %v1830
        %v1889 = vpop.xlane.xlu0 %1888
        %1890 = vadd.xlane.f32.xlu0 %v1833
        %v1891 = vpop.xlane.xlu0 %1890
        %1892 = vadd.xlane.f32.xlu0 %v1838
        %v1893 = vpop.xlane.xlu0 %1892
        %1894 = vadd.xlane.f32.xlu0 %v1841
        %v1895 = vpop.xlane.xlu0 %1894
        %1896 = vadd.xlane.f32.xlu0 %v1846
        %v1897 = vpop.xlane.xlu0 %1896
        %1898 = vadd.xlane.f32.xlu0 %v1849
        %v1899 = vpop.xlane.xlu0 %1898
        %1900 = vadd.xlane.f32.xlu0 %v1854
        %v1901 = vpop.xlane.xlu0 %1900
        %1902 = vadd.xlane.f32.xlu0 %v1857
        %v1903 = vpop.xlane.xlu0 %1902
        %1904 = vadd.xlane.f32.xlu0 %v1862
        %v1905 = vpop.xlane.xlu0 %1904
        %1906 = vadd.xlane.f32.xlu0 %v1865
        %v1907 = vpop.xlane.xlu0 %1906
        %1908 = vadd.xlane.f32.xlu0 %v1870
        %v1909 = vpop.xlane.xlu0 %1908
        %1910 = vadd.xlane.f32.xlu0 %v1873
        %v1911 = vpop.xlane.xlu0 %1910
        %1912 = vadd.xlane.f32.xlu0 %v1878
        %v1913 = vpop.xlane.xlu0 %1912
        %1914 = vadd.xlane.f32.xlu0 %v1881
        %v1915 = vpop.xlane.xlu0 %1914
        %v1916 = vmul.f32 %v1822, %v1822
        %v1917 = vmul.f32 %v1825, %v1825
        %v1918 = vmul.f32 %v1830, %v1830
        %v1919 = vmul.f32 %v1833, %v1833
        %v1920 = vmul.f32 %v1838, %v1838
        %v1921 = vmul.f32 %v1841, %v1841
        %v1922 = vmul.f32 %v1846, %v1846
        %v1923 = vmul.f32 %v1849, %v1849
        %v1924 = vmul.f32 %v1854, %v1854
        %v1925 = vmul.f32 %v1857, %v1857
        %v1926 = vmul.f32 %v1862, %v1862
        %v1927 = vmul.f32 %v1865, %v1865
        %v1928 = vmul.f32 %v1870, %v1870
        %v1929 = vmul.f32 %v1873, %v1873
        %v1930 = vmul.f32 %v1878, %v1878
        %v1931 = vmul.f32 %v1881, %v1881
        %1932 = vadd.xlane.f32.xlu0 %v1916
        %v1933 = vpop.xlane.xlu0 %1932
        %1934 = vadd.xlane.f32.xlu0 %v1917
        %v1935 = vpop.xlane.xlu0 %1934
        %1936 = vadd.xlane.f32.xlu0 %v1918
        %v1937 = vpop.xlane.xlu0 %1936
        %1938 = vadd.xlane.f32.xlu0 %v1919
        %v1939 = vpop.xlane.xlu0 %1938
        %1940 = vadd.xlane.f32.xlu0 %v1920
        %v1941 = vpop.xlane.xlu0 %1940
        %1942 = vadd.xlane.f32.xlu0 %v1921
        %v1943 = vpop.xlane.xlu0 %1942
        %1944 = vadd.xlane.f32.xlu0 %v1922
        %v1945 = vpop.xlane.xlu0 %1944
        %1946 = vadd.xlane.f32.xlu0 %v1923
        %v1947 = vpop.xlane.xlu0 %1946
        %1948 = vadd.xlane.f32.xlu0 %v1924
        %v1949 = vpop.xlane.xlu0 %1948
        %1950 = vadd.xlane.f32.xlu0 %v1925
        %v1951 = vpop.xlane.xlu0 %1950
        %1952 = vadd.xlane.f32.xlu0 %v1926
        %v1953 = vpop.xlane.xlu0 %1952
        %1954 = vadd.xlane.f32.xlu0 %v1927
        %v1955 = vpop.xlane.xlu0 %1954
        %1956 = vadd.xlane.f32.xlu0 %v1928
        %v1957 = vpop.xlane.xlu0 %1956
        %1958 = vadd.xlane.f32.xlu0 %v1929
        %v1959 = vpop.xlane.xlu0 %1958
        %1960 = vadd.xlane.f32.xlu0 %v1930
        %v1961 = vpop.xlane.xlu0 %1960
        %1962 = vadd.xlane.f32.xlu0 %v1931
        %v1963 = vpop.xlane.xlu0 %1962
        %v1964 = vmul.f32 %v1885, 0.0078125
        %v1965 = vmul.f32 %v1887, 0.0078125
        %v1966 = vmul.f32 %v1889, 0.0078125
        %v1967 = vmul.f32 %v1891, 0.0078125
        %v1968 = vmul.f32 %v1893, 0.0078125
        %v1969 = vmul.f32 %v1895, 0.0078125
        %v1970 = vmul.f32 %v1897, 0.0078125
        %v1971 = vmul.f32 %v1899, 0.0078125
        %v1972 = vmul.f32 %v1901, 0.0078125
        %v1973 = vmul.f32 %v1903, 0.0078125
        %v1974 = vmul.f32 %v1905, 0.0078125
        %v1975 = vmul.f32 %v1907, 0.0078125
        %v1976 = vmul.f32 %v1909, 0.0078125
        %v1977 = vmul.f32 %v1911, 0.0078125
        %v1978 = vmul.f32 %v1913, 0.0078125
        %v1979 = vmul.f32 %v1915, 0.0078125
        %v1980 = vmul.f32 %v1933, 0.0078125
        %v1981 = vmul.f32 %v1935, 0.0078125
        %v1982 = vmul.f32 %v1937, 0.0078125
        %v1983 = vmul.f32 %v1939, 0.0078125
        %v1984 = vmul.f32 %v1941, 0.0078125
        %v1985 = vmul.f32 %v1943, 0.0078125
        %v1986 = vmul.f32 %v1945, 0.0078125
        %v1987 = vmul.f32 %v1947, 0.0078125
        %v1988 = vmul.f32 %v1949, 0.0078125
        %v1989 = vmul.f32 %v1951, 0.0078125
        %v1990 = vmul.f32 %v1953, 0.0078125
        %v1991 = vmul.f32 %v1955, 0.0078125
        %v1992 = vmul.f32 %v1957, 0.0078125
        %v1993 = vmul.f32 %v1959, 0.0078125
        %v1994 = vmul.f32 %v1961, 0.0078125
        %v1995 = vmul.f32 %v1963, 0.0078125
        %v1996 = vmul.f32 %v1964, %v1964
        %v1997 = vmul.f32 %v1965, %v1965
        %v1998 = vmul.f32 %v1966, %v1966
        %v1999 = vmul.f32 %v1967, %v1967
        %v2000 = vmul.f32 %v1968, %v1968
        %v2001 = vmul.f32 %v1969, %v1969
        %v2002 = vmul.f32 %v1970, %v1970
        %v2003 = vmul.f32 %v1971, %v1971
        %v2004 = vmul.f32 %v1972, %v1972
        %v2005 = vmul.f32 %v1973, %v1973
        %v2006 = vmul.f32 %v1974, %v1974
        %v2007 = vmul.f32 %v1975, %v1975
        %v2008 = vmul.f32 %v1976, %v1976
        %v2009 = vmul.f32 %v1977, %v1977
        %v2010 = vmul.f32 %v1978, %v1978
        %v2011 = vmul.f32 %v1979, %v1979
        %v2012 = vsub.f32 %v1980, %v1996
        %v2013 = vsub.f32 %v1981, %v1997
        %v2014 = vsub.f32 %v1982, %v1998
        %v2015 = vsub.f32 %v1983, %v1999
        %v2016 = vsub.f32 %v1984, %v2000
        %v2017 = vsub.f32 %v1985, %v2001
        %v2018 = vsub.f32 %v1986, %v2002
        %v2019 = vsub.f32 %v1987, %v2003
        %v2020 = vsub.f32 %v1988, %v2004
        %v2021 = vsub.f32 %v1989, %v2005
        %v2022 = vsub.f32 %v1990, %v2006
        %v2023 = vsub.f32 %v1991, %v2007
        %v2024 = vsub.f32 %v1992, %v2008
        %v2025 = vsub.f32 %v1993, %v2009
        %v2026 = vsub.f32 %v1994, %v2010
        %v2027 = vsub.f32 %v1995, %v2011
        %v2028 = vmax.f32 %v2012, 0.0
        %v2029 = vmax.f32 %v2013, 0.0
        %v2030 = vmax.f32 %v2014, 0.0
        %v2031 = vmax.f32 %v2015, 0.0
        %v2032 = vmax.f32 %v2016, 0.0
        %v2033 = vmax.f32 %v2017, 0.0
        %v2034 = vmax.f32 %v2018, 0.0
        %v2035 = vmax.f32 %v2019, 0.0
        %v2036 = vmax.f32 %v2020, 0.0
        %v2037 = vmax.f32 %v2021, 0.0
        %v2038 = vmax.f32 %v2022, 0.0
        %v2039 = vmax.f32 %v2023, 0.0
        %v2040 = vmax.f32 %v2024, 0.0
        %v2041 = vmax.f32 %v2025, 0.0
        %v2042 = vmax.f32 %v2026, 0.0
        %v2043 = vmax.f32 %v2027, 0.0
        %v2044 = vadd.f32 %v2028, 1e-05
        %v2045 = vadd.f32 %v2029, 1e-05
        %v2046 = vadd.f32 %v2030, 1e-05
        %v2047 = vadd.f32 %v2031, 1e-05
        %v2048 = vadd.f32 %v2032, 1e-05
        %v2049 = vadd.f32 %v2033, 1e-05
        %v2050 = vadd.f32 %v2034, 1e-05
        %v2051 = vadd.f32 %v2035, 1e-05
        %v2052 = vadd.f32 %v2036, 1e-05
        %v2053 = vadd.f32 %v2037, 1e-05
        %v2054 = vadd.f32 %v2038, 1e-05
        %v2055 = vadd.f32 %v2039, 1e-05
        %v2056 = vadd.f32 %v2040, 1e-05
        %v2057 = vadd.f32 %v2041, 1e-05
        %v2058 = vadd.f32 %v2042, 1e-05
        %v2059 = vadd.f32 %v2043, 1e-05
        %v2060 = vrsqrt.pop %v2044
        %v2061 = vrsqrt.pop %v2045
        %v2062 = vrsqrt.pop %v2046
        %v2063 = vrsqrt.pop %v2047
        %v2064 = vrsqrt.pop %v2048
        %v2065 = vrsqrt.pop %v2049
        %v2066 = vrsqrt.pop %v2050
        %v2067 = vrsqrt.pop %v2051
        %v2068 = vrsqrt.pop %v2052
        %v2069 = vrsqrt.pop %v2053
        %v2070 = vrsqrt.pop %v2054
        %v2071 = vrsqrt.pop %v2055
        %v2072 = vrsqrt.pop %v2056
        %v2073 = vrsqrt.pop %v2057
        %v2074 = vrsqrt.pop %v2058
        %v2075 = vrsqrt.pop %v2059
        %v2076 = vsub.f32 %v1822, %v1964
        %v2077 = vsub.f32 %v1825, %v1965
        %v2078 = vsub.f32 %v1830, %v1966
        %v2079 = vsub.f32 %v1833, %v1967
        %v2080 = vsub.f32 %v1838, %v1968
        %v2081 = vsub.f32 %v1841, %v1969
        %v2082 = vsub.f32 %v1846, %v1970
        %v2083 = vsub.f32 %v1849, %v1971
        %v2084 = vsub.f32 %v1854, %v1972
        %v2085 = vsub.f32 %v1857, %v1973
        %v2086 = vsub.f32 %v1862, %v1974
        %v2087 = vsub.f32 %v1865, %v1975
        %v2088 = vsub.f32 %v1870, %v1976
        %v2089 = vsub.f32 %v1873, %v1977
        %v2090 = vsub.f32 %v1878, %v1978
        %v2091 = vsub.f32 %v1881, %v1979
        %v2092 = vmul.f32 %v2076, %v2060
        %v2093 = vmul.f32 %v2077, %v2061
        %v2094 = vmul.f32 %v2078, %v2062
        %v2095 = vmul.f32 %v2079, %v2063
        %v2096 = vmul.f32 %v2080, %v2064
        %v2097 = vmul.f32 %v2081, %v2065
        %v2098 = vmul.f32 %v2082, %v2066
        %v2099 = vmul.f32 %v2083, %v2067
        %v2100 = vmul.f32 %v2084, %v2068
        %v2101 = vmul.f32 %v2085, %v2069
        %v2102 = vmul.f32 %v2086, %v2070
        %v2103 = vmul.f32 %v2087, %v2071
        %v2104 = vmul.f32 %v2088, %v2072
        %v2105 = vmul.f32 %v2089, %v2073
        %v2106 = vmul.f32 %v2090, %v2074
        %v2107 = vmul.f32 %v2091, %v2075
        %v2108 = vlaneseq
        %v2109 = vshrl.u32 %v2108, 7
        %v2110 = vsub.s32 7, %v2109
        %v2111 = vrot.slane %v331, %v2110
        %v2112 = vmul.f32 %v2092, %v2111
        %v2113 = vmul.f32 %v2093, %v2111
        %v2114 = vmul.f32 %v2094, %v2111
        %v2115 = vmul.f32 %v2095, %v2111
        %v2116 = vmul.f32 %v2096, %v2111
        %v2117 = vmul.f32 %v2097, %v2111
        %v2118 = vmul.f32 %v2098, %v2111
        %v2119 = vmul.f32 %v2099, %v2111
        %v2120 = vmul.f32 %v2100, %v2111
        %v2121 = vmul.f32 %v2101, %v2111
        %v2122 = vmul.f32 %v2102, %v2111
        %v2123 = vmul.f32 %v2103, %v2111
        %v2124 = vmul.f32 %v2104, %v2111
        %v2125 = vmul.f32 %v2105, %v2111
        %v2126 = vmul.f32 %v2106, %v2111
        %v2127 = vmul.f32 %v2107, %v2111
        %v2128 = vlaneseq
        %v2129 = vshrl.u32 %v2128, 7
        %v2130 = vsub.s32 3, %v2129
        %v2131 = vrot.slane %v332, %v2130
        %v2132 = vadd.f32 %v2112, %v2131
        %v2133 = vadd.f32 %v2113, %v2131
        %v2134 = vadd.f32 %v2114, %v2131
        %v2135 = vadd.f32 %v2115, %v2131
        %v2136 = vadd.f32 %v2116, %v2131
        %v2137 = vadd.f32 %v2117, %v2131
        %v2138 = vadd.f32 %v2118, %v2131
        %v2139 = vadd.f32 %v2119, %v2131
        %v2140 = vadd.f32 %v2120, %v2131
        %v2141 = vadd.f32 %v2121, %v2131
        %v2142 = vadd.f32 %v2122, %v2131
        %v2143 = vadd.f32 %v2123, %v2131
        %v2144 = vadd.f32 %v2124, %v2131
        %v2145 = vadd.f32 %v2125, %v2131
        %v2146 = vadd.f32 %v2126, %v2131
        %v2147 = vadd.f32 %v2127, %v2131
        %v2148 = vmax.f32 %v2132, 0.0
        %v2149 = vmax.f32 %v2133, 0.0
        %v2150 = vmax.f32 %v2134, 0.0
        %v2151 = vmax.f32 %v2135, 0.0
        %v2152 = vmax.f32 %v2136, 0.0
        %v2153 = vmax.f32 %v2137, 0.0
        %v2154 = vmax.f32 %v2138, 0.0
        %v2155 = vmax.f32 %v2139, 0.0
        %v2156 = vmax.f32 %v2140, 0.0
        %v2157 = vmax.f32 %v2141, 0.0
        %v2158 = vmax.f32 %v2142, 0.0
        %v2159 = vmax.f32 %v2143, 0.0
        %v2160 = vmax.f32 %v2144, 0.0
        %v2161 = vmax.f32 %v2145, 0.0
        %v2162 = vmax.f32 %v2146, 0.0
        %v2163 = vmax.f32 %v2147, 0.0
        %v2164 = vpack.c.bf16 %v2149, %v2148
        %v2165 = vpack.c.bf16 %v2151, %v2150
        %v2166 = vpack.c.bf16 %v2153, %v2152
        %v2167 = vpack.c.bf16 %v2155, %v2154
        %v2168 = vpack.c.bf16 %v2157, %v2156
        %v2169 = vpack.c.bf16 %v2159, %v2158
        %v2170 = vpack.c.bf16 %v2161, %v2160
        %v2171 = vpack.c.bf16 %v2163, %v2162
        %v2172 = vld [vmem:[#allocation8] sm:$0xf]
        %v2173 = vld [vmem:[#allocation8 + $0x4] sm:$0xf]
        %v2174 = vld [vmem:[#allocation8 + $0x8] sm:$0xf]
        %v2175 = vld [vmem:[#allocation8 + $0xc] sm:$0xf]
        %v2176 = vld [vmem:[#allocation8 + $0x10] sm:$0xf]
        %v2177 = vld [vmem:[#allocation8 + $0x14] sm:$0xf]
        %v2178 = vld [vmem:[#allocation8 + $0x18] sm:$0xf]
        %v2179 = vld [vmem:[#allocation8 + $0x1c] sm:$0xf]
        %v2180 = vld [vmem:[#allocation8 + $0x20] sm:$0xf]
        %v2181 = vld [vmem:[#allocation8 + $0x24] sm:$0xf]
        %v2182 = vld [vmem:[#allocation8 + $0x28] sm:$0xf]
        %v2183 = vld [vmem:[#allocation8 + $0x2c] sm:$0xf]
        %v2184 = vld [vmem:[#allocation8 + $0x30] sm:$0xf]
        %v2185 = vld [vmem:[#allocation8 + $0x34] sm:$0xf]
        %v2186 = vld [vmem:[#allocation8 + $0x38] sm:$0xf]
        %v2187 = vld [vmem:[#allocation8 + $0x3c] sm:$0xf]
        %v2189 = vlaneseq
        %v2190 = vshrl.u32 %v2189, 7
        %v2191 = vsub.s32 0, %v2190
        %v2192 = vrot.slane %v333, %v2191
        %v2210 = vunpack.c.l.b16 %v2172
        %v2211 = vunpack.c.l.b16 %v2173
        %v2212 = vunpack.c.l.b16 %v2174
        %v2213 = vunpack.c.l.b16 %v2175
        %v2214 = vunpack.c.l.b16 %v2176
        %v2215 = vunpack.c.l.b16 %v2177
        %v2216 = vunpack.c.l.b16 %v2178
        %v2217 = vunpack.c.l.b16 %v2179
        %v2218 = vunpack.c.l.b16 %v2180
        %v2219 = vunpack.c.l.b16 %v2181
        %v2220 = vunpack.c.l.b16 %v2182
        %v2221 = vunpack.c.l.b16 %v2183
        %v2222 = vunpack.c.l.b16 %v2184
        %v2223 = vunpack.c.l.b16 %v2185
        %v2224 = vunpack.c.l.b16 %v2186
        %v2225 = vunpack.c.l.b16 %v2187
        %v2226 = vpack.c.b16 %v2211, %v2210
        %v2227 = vpack.c.b16 %v2213, %v2212
        %v2228 = vpack.c.b16 %v2215, %v2214
        %v2229 = vpack.c.b16 %v2217, %v2216
        %v2230 = vpack.c.b16 %v2219, %v2218
        %v2231 = vpack.c.b16 %v2221, %v2220
        %v2232 = vpack.c.b16 %v2223, %v2222
        %v2233 = vpack.c.b16 %v2225, %v2224
        %2242 = vmatprep.subr.bf16.mxu0 0
        %2243 = vmatpush1.bf16.msra.mxu0 %v2226
        %2244 = vmatprep.subr.bf16.mxu0 0
        %2245 = vmatpush1.bf16.msra.mxu0 %v2227
        %2246 = vmatprep.subr.bf16.mxu0 0
        %2247 = vmatpush1.bf16.msra.mxu0 %v2228
        %2248 = vmatprep.subr.bf16.mxu0 0
        %2249 = vmatpush1.bf16.msra.mxu0 %v2229
        %2250 = vmatprep.subr.bf16.mxu0 0
        %2251 = vmatpush1.bf16.msra.mxu0 %v2230
        %2252 = vmatprep.subr.bf16.mxu0 0
        %2253 = vmatpush1.bf16.msra.mxu0 %v2231
        %2254 = vmatprep.subr.bf16.mxu0 0
        %2255 = vmatpush1.bf16.msra.mxu0 %v2232
        %2256 = vmatprep.subr.bf16.mxu0 0
        %2257 = vmatpush1.bf16.msra.mxu0 %v2233
        %2258 = vmatprep.subr.bf16.mxu0 0
        %2259 = vmatpush1.bf16.msra.mxu0 0
        %2260 = vmatprep.subr.bf16.mxu0 0
        %2261 = vmatpush1.bf16.msra.mxu0 0
        %2262 = vmatprep.subr.bf16.mxu0 0
        %2263 = vmatpush1.bf16.msra.mxu0 0
        %2264 = vmatprep.subr.bf16.mxu0 0
        %2265 = vmatpush1.bf16.msra.mxu0 0
        %2266 = vmatprep.subr.bf16.mxu0 0
        %2267 = vmatpush1.bf16.msra.mxu0 0
        %2268 = vmatprep.subr.bf16.mxu0 0
        %2269 = vmatpush1.bf16.msra.mxu0 0
        %2270 = vmatprep.subr.bf16.mxu0 0
        %2271 = vmatpush1.bf16.msra.mxu0 0
        %2272 = vmatprep.subr.bf16.mxu0 0
        %2273 = vmatpush1.bf16.msra.mxu0 0
        %2274 = vmatprep.mubr.bf16.mxu0 0
        %2275 = vmatmul.mubr.bf16.gmra.mrb[0].mxu0 %v2164
        %v2276 = vpop.f32.mrb[0].mxu0
        %v2277 = vadd.f32 %v2192, %v2276
        %v2278 = vpop.f32.mrb[0].mxu0
        %v2279 = vpop.f32.mrb[0].mxu0
        %v2280 = vadd.f32 %v2192, %v2279
        %v2281 = vpop.f32.mrb[0].mxu0
        %2282 = vmatprep.mubr.bf16.mxu0 0
        %2283 = vmatmul.mubr.bf16.gmra.mrb[0].mxu0 %v2165
        %v2284 = vpop.f32.mrb[0].mxu0
        %v2285 = vadd.f32 %v2192, %v2284
        %v2286 = vpop.f32.mrb[0].mxu0
        %v2287 = vpop.f32.mrb[0].mxu0
        %v2288 = vadd.f32 %v2192, %v2287
        %v2289 = vpop.f32.mrb[0].mxu0
        %2290 = vmatprep.mubr.bf16.mxu0 0
        %2291 = vmatmul.mubr.bf16.gmra.mrb[0].mxu0 %v2166
        %v2292 = vpop.f32.mrb[0].mxu0
        %v2293 = vadd.f32 %v2192, %v2292
        %v2294 = vpop.f32.mrb[0].mxu0
        %v2295 = vpop.f32.mrb[0].mxu0
        %v2296 = vadd.f32 %v2192, %v2295
        %v2297 = vpop.f32.mrb[0].mxu0
        %2298 = vmatprep.mubr.bf16.mxu0 0
        %2299 = vmatmul.mubr.bf16.gmra.mrb[0].mxu0 %v2167
        %v2300 = vpop.f32.mrb[0].mxu0
        %v2301 = vadd.f32 %v2192, %v2300
        %v2302 = vpop.f32.mrb[0].mxu0
        %v2303 = vpop.f32.mrb[0].mxu0
        %v2304 = vadd.f32 %v2192, %v2303
        %v2305 = vpop.f32.mrb[0].mxu0
        %2306 = vmatprep.mubr.bf16.mxu0 0
        %2307 = vmatmul.mubr.bf16.gmra.mrb[0].mxu0 %v2168
        %v2308 = vpop.f32.mrb[0].mxu0
        %v2309 = vadd.f32 %v2192, %v2308
        %v2310 = vpop.f32.mrb[0].mxu0
        %v2311 = vpop.f32.mrb[0].mxu0
        %v2312 = vadd.f32 %v2192, %v2311
        %v2313 = vpop.f32.mrb[0].mxu0
        %2314 = vmatprep.mubr.bf16.mxu0 0
        %2315 = vmatmul.mubr.bf16.gmra.mrb[0].mxu0 %v2169
        %v2316 = vpop.f32.mrb[0].mxu0
        %v2317 = vadd.f32 %v2192, %v2316
        %v2318 = vpop.f32.mrb[0].mxu0
        %v2319 = vpop.f32.mrb[0].mxu0
        %v2320 = vadd.f32 %v2192, %v2319
        %v2321 = vpop.f32.mrb[0].mxu0
        %2322 = vmatprep.mubr.bf16.mxu0 0
        %2323 = vmatmul.mubr.bf16.gmra.mrb[0].mxu0 %v2170
        %v2324 = vpop.f32.mrb[0].mxu0
        %v2325 = vadd.f32 %v2192, %v2324
        %v2326 = vpop.f32.mrb[0].mxu0
        %v2327 = vpop.f32.mrb[0].mxu0
        %v2328 = vadd.f32 %v2192, %v2327
        %v2329 = vpop.f32.mrb[0].mxu0
        %2330 = vmatprep.mubr.bf16.mxu0 0
        %2331 = vmatmul.mubr.bf16.gmra.mrb[0].mxu0 %v2171
        %v2332 = vpop.f32.mrb[0].mxu0
        %v2333 = vadd.f32 %v2192, %v2332
        %v2334 = vpop.f32.mrb[0].mxu0
        %v2335 = vpop.f32.mrb[0].mxu0
        %v2336 = vadd.f32 %v2192, %v2335
        %v2337 = vpop.f32.mrb[0].mxu0
        %2338 = vdwg.mxu0
        %2339 = vst [vmem:[%s327] sm:$0xff] %v2277
        %2340 = vst [vmem:[%s327 + $0x8] sm:$0xff] %v2280
        %2341 = vst [vmem:[%s327 + $0x10] sm:$0xff] %v2285
        %2342 = vst [vmem:[%s327 + $0x18] sm:$0xff] %v2288
        %2343 = vst [vmem:[%s327 + $0x20] sm:$0xff] %v2293
        %2344 = vst [vmem:[%s327 + $0x28] sm:$0xff] %v2296
        %2345 = vst [vmem:[%s327 + $0x30] sm:$0xff] %v2301
        %2346 = vst [vmem:[%s327 + $0x38] sm:$0xff] %v2304
        %2347 = vst [vmem:[%s327 + $0x40] sm:$0xff] %v2309
        %2348 = vst [vmem:[%s327 + $0x48] sm:$0xff] %v2312
        %2349 = vst [vmem:[%s327 + $0x50] sm:$0xff] %v2317
        %2350 = vst [vmem:[%s327 + $0x58] sm:$0xff] %v2320
        %2351 = vst [vmem:[%s327 + $0x60] sm:$0xff] %v2325
        %2352 = vst [vmem:[%s327 + $0x68] sm:$0xff] %v2328
        %2353 = vst [vmem:[%s327 + $0x70] sm:$0xff] %v2333
        %2354 = vst [vmem:[%s327 + $0x78] sm:$0xff] %v2336
        %s2355 = sand.u32 %s164, 1
        %s2356 = scalar_lea.sflag [#allocation4], %s2355
        %s2357 = sand.u32 %s164, 1
        %s2358 = smul.addr %s2357, 128
        %s2359 = scalar_lea.vmem [#allocation11], %s2358
        // Predicated region
        $region65: #{tpu_custom_call.1} parent=43 // pred_check
          %p2360 = pneg %p174
        $region66: #{tpu_custom_call.1} parent=43 // pred_check_branch
          %2362 = sbr.rel (%p2360) target = $region68
        $region67: #{tpu_custom_call.1} parent=43 // pred_region
          %s2363 = smul.u32 16, %s25
          %s2365 = ssub.s32 2048, 2048
          %2366 = vsyncadd %s2356, %s2365
          %s2367 = smul.addr %s2363, 128
          %s2368 = scalar_lea.hbm %s6, %s2367
          %s2369 = sshll.u32 %s2359, 4
          %s2370 = int_to_ptr.vmem [resolvable:$true] %s2369
          %2375 = dma.vmem_to_hbm [thread:$0]  %s2370, 2048, %s2368, %s2356, 128, 128, 8
        $region68: #{tpu_custom_call.1} parent=43 // pred_fallthru
          _
      $region44: #{tpu_custom_call.1} parent=5 // pred_fallthru
        _
      %p2376 = scmp.le.s32.totalorder 2, %s20
      // Predicated region
      $region69: #{tpu_custom_call.1} parent=5 // pred_check
        %p2377 = pneg %p2376
      $region70: #{tpu_custom_call.1} parent=5 // pred_check_branch
        %2379 = sbr.rel (%p2377) target = $region72
      $region71: #{tpu_custom_call.1} parent=5 // pred_region
        %s2380 = ssub.s32 %s20, 2
        // Predicated region
        $region73: #{tpu_custom_call.1} parent=71 // pred_check
          %p2381 = pneg %p180
        $region74: #{tpu_custom_call.1} parent=71 // pred_check_branch
          %2383 = sbr.rel (%p2381) target = $region76
        $region75: #{tpu_custom_call.1} parent=71 // pred_region
          %s2384 = sand.u32 %s165, 1
          %s2385 = scalar_lea.sflag [#allocation4], %s2384
          %s2386 = sand.u32 %s165, 1
          %s2387 = smul.addr %s2386, 128
          %s2388 = scalar_lea.vmem [#allocation11], %s2387
          %2389 = dma.done %s2385, 2048
        $region76: #{tpu_custom_call.1} parent=71 // pred_fallthru
          _
      $region72: #{tpu_custom_call.1} parent=5 // pred_fallthru
        _
    $region6: #{tpu_custom_call.1} parent=1 // loop_footer
      %s24 = sadd.s32 1, %s20
    $region7: #{tpu_custom_call.1} parent=1 // loop_footer_branch
      %19 = sbr.rel target = $region3
    $region8: #{tpu_custom_call.1} parent=1 // loop_exit
      _
    %2390 = vsyncpa [#allocation3], 1
    %s2391 = scalar_lea.sflag [#allocation3], 1
    %2392 = vsyncpa %s2391, 1
    %2393 = vsyncpa [#allocation6], 1
    %2394 = vsyncpa [#allocation9], 1
    %2395 = vsyncpa [#allocation4], 1
    %s2396 = scalar_lea.sflag [#allocation4], 1
    %2397 = vsyncpa %s2396, 1

</llo_original>
